<compile_context>
chip_gen: v7x
topology: tpu7x:2x2x1
jax: 0.10.0
libtpu: 0.0.40
codegen_flags: <defaults>
</compile_context>

<pallas_src>
import jax
import jax.numpy as jnp
from jax.experimental import pallas as pl
from jax.experimental.pallas import tpu as pltpu

# ---------------------------------------------------------------------------
# Model hyper-parameters (small, consistent with the PyTorch module's forward)
# ---------------------------------------------------------------------------
BATCH = 2
SEQ = 8
WIN = 3
EMB = 32
NH1 = 32
NH2 = 32
NY = 16
NZ = 16
VOCAB = 50
IN1 = EMB * WIN          # 96 : input width of RNN cell 1
K2 = NH1 + NH2           # 64 : fused [h1 | h2_prev] contraction width
ROWS = SEQ * BATCH       # 16 : total time-major rows


# ---------------------------------------------------------------------------
# Pallas kernel: whole stacked-RNNCell recurrence + both FC heads in ONE
# gridless invocation.
# ---------------------------------------------------------------------------
def rnn_stack_kernel(x_ref,                       # (ROWS, IN1)   time-major embedded windows
                     wih1_ref, b1_ref,            # (IN1, NH1) (1, NH1)   cell-1 input proj (+ fused biases)
                     whh1_ref,                    # (NH1, NH1)            cell-1 hidden proj
                     w2_ref, b2_ref,              # (K2, NH2)  (1, NH2)   fused cell-2 [ih|hh]
                     wfc1_ref, bfc1_ref,          # (NH1, NY)  (1, NY)
                     wfc2_ref, bfc2_ref,          # (NH2, NZ)  (1, NZ)
                     out1_ref, out2_ref,          # (ROWS, NY) (ROWS, NZ) time-major outputs
                     h1_scr, h2_scr):             # (ROWS, NH1) (ROWS, NH2) VMEM scratch
    # Hoist weight/bias loads (each read exactly once).
    whh1 = whh1_ref[...]
    w2 = w2_ref[...]
    b2 = b2_ref[...]

    # Prologue: ReLU + time-invariant input projection for ALL SEQ*B rows as a
    # single M=16, K=96 matmul; biases (b_ih1 + b_hh1) pre-added here.
    xp = jnp.dot(jnp.maximum(x_ref[...], 0.0), wih1_ref[...],
                 preferred_element_type=jnp.float32) + b1_ref[...]   # (ROWS, NH1)

    h1 = jnp.zeros((BATCH, NH1), jnp.float32)
    h2 = jnp.zeros((BATCH, NH2), jnp.float32)
    for t in range(SEQ):                          # fully unrolled recurrence
        xp_t = xp[t * BATCH:(t + 1) * BATCH, :]   # (B, NH1), static slice

        # cell 1: tanh(xp_t + h1_prev @ W_hh1^T)          (K = 32 on the MXU)
        h1 = jnp.tanh(xp_t + jnp.dot(h1, whh1, preferred_element_type=jnp.float32))

        # cell 2: tanh([h1 | h2_prev] @ [W_ih2^T ; W_hh2^T] + (b_ih2 + b_hh2))
        h2 = jnp.tanh(
            jnp.dot(jnp.concatenate([h1, h2], axis=-1), w2,
                    preferred_element_type=jnp.float32) + b2)

        # Record states (off the serial critical path: nothing reads them
        # until after the loop).
        h1_scr[t * BATCH:(t + 1) * BATCH, :] = h1
        h2_scr[t * BATCH:(t + 1) * BATCH, :] = h2

    # Epilogue: both FC heads as two M=16 matmuls, stored directly.
    out1_ref[...] = jnp.dot(h1_scr[...], wfc1_ref[...],
                            preferred_element_type=jnp.float32) + bfc1_ref[...]
    out2_ref[...] = jnp.dot(h2_scr[...], wfc2_ref[...],
                            preferred_element_type=jnp.float32) + bfc2_ref[...]


def rnn_model_pallas(x_idx, params):
    """x_idx: (BATCH, SEQ, WIN) int32 token indices."""
    # TODO(synk): nn.Embedding gather stays in plain JAX; a Pallas DMA-gather is
    # not worth it at this size.
    emb_tbl = params["embedding"]                                   # (VOCAB, EMB)
    # Time-major (mirrors the PyTorch permute): (B,S,W) -> (S,B,W*E) -> (S*B, IN1)
    x_emb = emb_tbl[x_idx]                                          # (B,S,W,E)
    x_tm = jnp.transpose(x_emb, (1, 0, 2, 3)).reshape(ROWS, IN1).astype(jnp.float32)

    # Cell-1: keep input and hidden projections separate (input proj is hoisted
    # in-kernel); fold both biases into one.
    wih1 = params["w_ih1"].T                                        # (IN1, NH1)
    whh1 = params["w_hh1"].T                                        # (NH1, NH1)
    b1 = (params["b_ih1"] + params["b_hh1"]).reshape(1, NH1)

    # Cell-2: fuse input/hidden weights along K and combine the biases.
    w2 = jnp.concatenate([params["w_ih2"].T, params["w_hh2"].T], axis=0)  # (K2, NH2)
    b2 = (params["b_ih2"] + params["b_hh2"]).reshape(1, NH2)

    # FC heads (applied once, after the recurrence, inside the kernel).
    wfc1 = params["w_fc1"].T                                        # (NH1, NY)
    bfc1 = params["b_fc1"].reshape(1, NY)
    wfc2 = params["w_fc2"].T                                        # (NH2, NZ)
    bfc2 = params["b_fc2"].reshape(1, NZ)

    # Gridless call: total footprint ~40 KB, far below VMEM on every TPU
    # generation; a SEQ grid would only add pipeline bookkeeping and break the
    # in-vreg recurrence.
    o1_tm, o2_tm = pl.pallas_call(
        rnn_stack_kernel,
        out_shape=(jax.ShapeDtypeStruct((ROWS, NY), jnp.float32),
                   jax.ShapeDtypeStruct((ROWS, NZ), jnp.float32)),
        scratch_shapes=[pltpu.VMEM((ROWS, NH1), jnp.float32),
                        pltpu.VMEM((ROWS, NH2), jnp.float32)],
    )(x_tm, wih1, b1, whh1, w2, b2, wfc1, bfc1, wfc2, bfc2)

    # (SEQ*B, ny) time-major -> (B*SEQ, ny) batch-major; pure glue, identical to
    # the PyTorch permute((1,0,2)).reshape(...).
    out1 = o1_tm.reshape(SEQ, BATCH, NY).transpose(1, 0, 2).reshape(BATCH * SEQ, NY)
    out2 = o2_tm.reshape(SEQ, BATCH, NZ).transpose(1, 0, 2).reshape(BATCH * SEQ, NZ)
    return out1, out2


# ---------------------------------------------------------------------------
# Pure-JAX reference (mirrors the PyTorch forward) for a correctness check.
# ---------------------------------------------------------------------------
def rnn_model_ref(x_idx, params):
    x = params["embedding"][x_idx]                    # (B,S,W,E)
    x = jnp.transpose(x, (1, 0, 2, 3)).reshape(SEQ, BATCH, IN1)
    x = jnp.maximum(x, 0.0)
    h1 = jnp.zeros((BATCH, NH1), jnp.float32)
    h2 = jnp.zeros((BATCH, NH2), jnp.float32)
    o1s, o2s = [], []
    for i in range(SEQ):
        h1 = jnp.tanh(x[i] @ params["w_ih1"].T + params["b_ih1"]
                      + h1 @ params["w_hh1"].T + params["b_hh1"])
        h2 = jnp.tanh(h1 @ params["w_ih2"].T + params["b_ih2"]
                      + h2 @ params["w_hh2"].T + params["b_hh2"])
        o1s.append(h1)
        o2s.append(h2)
    o1 = jnp.transpose(jnp.stack(o1s, 0), (1, 0, 2)).reshape(BATCH * SEQ, NH1)
    o2 = jnp.transpose(jnp.stack(o2s, 0), (1, 0, 2)).reshape(BATCH * SEQ, NH2)
    out1 = o1 @ params["w_fc1"].T + params["b_fc1"]
    out2 = o2 @ params["w_fc2"].T + params["b_fc2"]
    return out1, out2


def init_params(key):
    ks = jax.random.split(key, 14)
    u = lambda k, shape, s: jax.random.uniform(k, shape, jnp.float32, -s, s)
    return {
        "embedding": u(ks[0], (VOCAB, EMB), 1.0),
        "w_ih1": u(ks[1], (NH1, IN1), 0.1), "w_hh1": u(ks[2], (NH1, NH1), 0.1),
        "b_ih1": u(ks[3], (NH1,), 0.1),     "b_hh1": u(ks[4], (NH1,), 0.1),
        "w_ih2": u(ks[5], (NH2, NH1), 0.1), "w_hh2": u(ks[6], (NH2, NH2), 0.1),
        "b_ih2": u(ks[7], (NH2,), 0.1),     "b_hh2": u(ks[8], (NH2,), 0.1),
        "w_fc1": u(ks[9], (NY, NH1), 0.1),  "b_fc1": u(ks[10], (NY,), 0.1),
        "w_fc2": u(ks[11], (NZ, NH2), 0.1), "b_fc2": u(ks[12], (NZ,), 0.1),
    }


if __name__ == "__main__":
    key = jax.random.PRNGKey(0)
    pkey, xkey = jax.random.split(key)
    params = init_params(pkey)
    x_idx = jax.random.randint(xkey, (BATCH, SEQ, WIN), 0, VOCAB, dtype=jnp.int32)

    out1, out2 = jax.jit(rnn_model_pallas)(x_idx, params)
    jax.block_until_ready((out1, out2))

    ref1, ref2 = rnn_model_ref(x_idx, params)
    assert out1.shape == (BATCH * SEQ, NY) and out2.shape == (BATCH * SEQ, NZ)
    assert jnp.allclose(out1, ref1, atol=2e-5, rtol=2e-5)
    assert jnp.allclose(out2, ref2, atol=2e-5, rtol=2e-5)
    print("KERNEL_OK")
</pallas_src>

<mosaic_0001>
module attributes {stable_mosaic.version = 11 : i64} {
  func.func @rnn_stack_kernel(%arg0: memref<16x96xf32, #tpu.memory_space<vmem>>, %arg1: memref<96x32xf32, #tpu.memory_space<vmem>>, %arg2: memref<1x32xf32, #tpu.memory_space<vmem>>, %arg3: memref<32x32xf32, #tpu.memory_space<vmem>>, %arg4: memref<64x32xf32, #tpu.memory_space<vmem>>, %arg5: memref<1x32xf32, #tpu.memory_space<vmem>>, %arg6: memref<32x16xf32, #tpu.memory_space<vmem>>, %arg7: memref<1x16xf32, #tpu.memory_space<vmem>>, %arg8: memref<32x16xf32, #tpu.memory_space<vmem>>, %arg9: memref<1x16xf32, #tpu.memory_space<vmem>>, %arg10: memref<16x16xf32, #tpu.memory_space<vmem>>, %arg11: memref<16x16xf32, #tpu.memory_space<vmem>>, %arg12: memref<16x32xf32, #tpu.memory_space<vmem>>, %arg13: memref<16x32xf32, #tpu.memory_space<vmem>>) attributes {dimension_semantics = [], scalar_prefetch = 0 : i64, scratch_operands = 2 : i64, tpu.core_type = #tpu.core_type<tc>} {
    %c0 = arith.constant 0 : index
    %c0_0 = arith.constant 0 : index
    %0 = vector.load %arg3[%c0, %c0_0] : memref<32x32xf32, #tpu.memory_space<vmem>>, vector<32x32xf32>
    %c0_1 = arith.constant 0 : index
    %c0_2 = arith.constant 0 : index
    %1 = vector.load %arg4[%c0_1, %c0_2] : memref<64x32xf32, #tpu.memory_space<vmem>>, vector<64x32xf32>
    %c0_3 = arith.constant 0 : index
    %c0_4 = arith.constant 0 : index
    %2 = vector.load %arg5[%c0_3, %c0_4] : memref<1x32xf32, #tpu.memory_space<vmem>>, vector<1x32xf32>
    %c0_5 = arith.constant 0 : index
    %c0_6 = arith.constant 0 : index
    %3 = vector.load %arg0[%c0_5, %c0_6] : memref<16x96xf32, #tpu.memory_space<vmem>>, vector<16x96xf32>
    %cst = arith.constant 0.000000e+00 : f32
    %4 = vector.broadcast %cst : f32 to vector<16x96xf32>
    %5 = arith.maximumf %3, %4 : vector<16x96xf32>
    %c0_7 = arith.constant 0 : index
    %c0_8 = arith.constant 0 : index
    %6 = vector.load %arg1[%c0_7, %c0_8] : memref<96x32xf32, #tpu.memory_space<vmem>>, vector<96x32xf32>
    %cst_9 = arith.constant dense<0.000000e+00> : vector<16x32xf32>
    %7 = tpu.matmul %5, %6, %cst_9 {dimension_numbers = #tpu.dot_dimension_numbers<[1], [0], [0], [1], [0, 0, 1, 1], [], []>} : vector<16x96xf32>, vector<96x32xf32>, vector<16x32xf32> -> vector<16x32xf32>
    %c0_10 = arith.constant 0 : index
    %c0_11 = arith.constant 0 : index
    %8 = vector.load %arg2[%c0_10, %c0_11] : memref<1x32xf32, #tpu.memory_space<vmem>>, vector<1x32xf32>
    %9 = vector.broadcast %8 : vector<1x32xf32> to vector<16x32xf32>
    %10 = arith.addf %7, %9 : vector<16x32xf32>
    %cst_12 = arith.constant 0.000000e+00 : f32
    %11 = vector.broadcast %cst_12 : f32 to vector<2x32xf32>
    %cst_13 = arith.constant 0.000000e+00 : f32
    %12 = vector.broadcast %cst_13 : f32 to vector<2x32xf32>
    %13 = vector.extract_strided_slice %10 {offsets = [0, 0], sizes = [2, 32], strides = [1, 1]} : vector<16x32xf32> to vector<2x32xf32>
    %cst_14 = arith.constant dense<0.000000e+00> : vector<2x32xf32>
    %14 = tpu.matmul %11, %0, %cst_14 {dimension_numbers = #tpu.dot_dimension_numbers<[1], [0], [0], [1], [0, 0, 1, 1], [], []>} : vector<2x32xf32>, vector<32x32xf32>, vector<2x32xf32> -> vector<2x32xf32>
    %15 = arith.addf %13, %14 : vector<2x32xf32>
    %16 = math.tanh %15 : vector<2x32xf32>
    %17 = tpu.concatenate %16, %12 in 1 : vector<2x32xf32>, vector<2x32xf32> -> vector<2x64xf32>
    %cst_15 = arith.constant dense<0.000000e+00> : vector<2x32xf32>
    %18 = tpu.matmul %17, %1, %cst_15 {dimension_numbers = #tpu.dot_dimension_numbers<[1], [0], [0], [1], [0, 0, 1, 1], [], []>} : vector<2x64xf32>, vector<64x32xf32>, vector<2x32xf32> -> vector<2x32xf32>
    %19 = vector.broadcast %2 : vector<1x32xf32> to vector<2x32xf32>
    %20 = arith.addf %18, %19 : vector<2x32xf32>
    %21 = math.tanh %20 : vector<2x32xf32>
    %c0_16 = arith.constant 0 : index
    %c0_17 = arith.constant 0 : index
    %22 = vector.load %arg12[%c0_16, %c0_17] : memref<16x32xf32, #tpu.memory_space<vmem>>, vector<2x32xf32>
    tpu.vector_store %arg12[%c0_16, %c0_17], %16 {strides = array<i32>} : memref<16x32xf32, #tpu.memory_space<vmem>>, vector<2x32xf32>,
    %c0_18 = arith.constant 0 : index
    %c0_19 = arith.constant 0 : index
    %23 = vector.load %arg13[%c0_18, %c0_19] : memref<16x32xf32, #tpu.memory_space<vmem>>, vector<2x32xf32>
    tpu.vector_store %arg13[%c0_18, %c0_19], %21 {strides = array<i32>} : memref<16x32xf32, #tpu.memory_space<vmem>>, vector<2x32xf32>,
    %24 = vector.extract_strided_slice %10 {offsets = [2, 0], sizes = [2, 32], strides = [1, 1]} : vector<16x32xf32> to vector<2x32xf32>
    %cst_20 = arith.constant dense<0.000000e+00> : vector<2x32xf32>
    %25 = tpu.matmul %16, %0, %cst_20 {dimension_numbers = #tpu.dot_dimension_numbers<[1], [0], [0], [1], [0, 0, 1, 1], [], []>} : vector<2x32xf32>, vector<32x32xf32>, vector<2x32xf32> -> vector<2x32xf32>
    %26 = arith.addf %24, %25 : vector<2x32xf32>
    %27 = math.tanh %26 : vector<2x32xf32>
    %28 = tpu.concatenate %27, %21 in 1 : vector<2x32xf32>, vector<2x32xf32> -> vector<2x64xf32>
    %cst_21 = arith.constant dense<0.000000e+00> : vector<2x32xf32>
    %29 = tpu.matmul %28, %1, %cst_21 {dimension_numbers = #tpu.dot_dimension_numbers<[1], [0], [0], [1], [0, 0, 1, 1], [], []>} : vector<2x64xf32>, vector<64x32xf32>, vector<2x32xf32> -> vector<2x32xf32>
    %30 = vector.broadcast %2 : vector<1x32xf32> to vector<2x32xf32>
    %31 = arith.addf %29, %30 : vector<2x32xf32>
    %32 = math.tanh %31 : vector<2x32xf32>
    %c2 = arith.constant 2 : index
    %c0_22 = arith.constant 0 : index
    %33 = vector.load %arg12[%c2, %c0_22] : memref<16x32xf32, #tpu.memory_space<vmem>>, vector<2x32xf32>
    tpu.vector_store %arg12[%c2, %c0_22], %27 {strides = array<i32>} : memref<16x32xf32, #tpu.memory_space<vmem>>, vector<2x32xf32>,
    %c2_23 = arith.constant 2 : index
    %c0_24 = arith.constant 0 : index
    %34 = vector.load %arg13[%c2_23, %c0_24] : memref<16x32xf32, #tpu.memory_space<vmem>>, vector<2x32xf32>
    tpu.vector_store %arg13[%c2_23, %c0_24], %32 {strides = array<i32>} : memref<16x32xf32, #tpu.memory_space<vmem>>, vector<2x32xf32>,
    %35 = vector.extract_strided_slice %10 {offsets = [4, 0], sizes = [2, 32], strides = [1, 1]} : vector<16x32xf32> to vector<2x32xf32>
    %cst_25 = arith.constant dense<0.000000e+00> : vector<2x32xf32>
    %36 = tpu.matmul %27, %0, %cst_25 {dimension_numbers = #tpu.dot_dimension_numbers<[1], [0], [0], [1], [0, 0, 1, 1], [], []>} : vector<2x32xf32>, vector<32x32xf32>, vector<2x32xf32> -> vector<2x32xf32>
    %37 = arith.addf %35, %36 : vector<2x32xf32>
    %38 = math.tanh %37 : vector<2x32xf32>
    %39 = tpu.concatenate %38, %32 in 1 : vector<2x32xf32>, vector<2x32xf32> -> vector<2x64xf32>
    %cst_26 = arith.constant dense<0.000000e+00> : vector<2x32xf32>
    %40 = tpu.matmul %39, %1, %cst_26 {dimension_numbers = #tpu.dot_dimension_numbers<[1], [0], [0], [1], [0, 0, 1, 1], [], []>} : vector<2x64xf32>, vector<64x32xf32>, vector<2x32xf32> -> vector<2x32xf32>
    %41 = vector.broadcast %2 : vector<1x32xf32> to vector<2x32xf32>
    %42 = arith.addf %40, %41 : vector<2x32xf32>
    %43 = math.tanh %42 : vector<2x32xf32>
    %c4 = arith.constant 4 : index
    %c0_27 = arith.constant 0 : index
    %44 = vector.load %arg12[%c4, %c0_27] : memref<16x32xf32, #tpu.memory_space<vmem>>, vector<2x32xf32>
    tpu.vector_store %arg12[%c4, %c0_27], %38 {strides = array<i32>} : memref<16x32xf32, #tpu.memory_space<vmem>>, vector<2x32xf32>,
    %c4_28 = arith.constant 4 : index
    %c0_29 = arith.constant 0 : index
    %45 = vector.load %arg13[%c4_28, %c0_29] : memref<16x32xf32, #tpu.memory_space<vmem>>, vector<2x32xf32>
    tpu.vector_store %arg13[%c4_28, %c0_29], %43 {strides = array<i32>} : memref<16x32xf32, #tpu.memory_space<vmem>>, vector<2x32xf32>,
    %46 = vector.extract_strided_slice %10 {offsets = [6, 0], sizes = [2, 32], strides = [1, 1]} : vector<16x32xf32> to vector<2x32xf32>
    %cst_30 = arith.constant dense<0.000000e+00> : vector<2x32xf32>
    %47 = tpu.matmul %38, %0, %cst_30 {dimension_numbers = #tpu.dot_dimension_numbers<[1], [0], [0], [1], [0, 0, 1, 1], [], []>} : vector<2x32xf32>, vector<32x32xf32>, vector<2x32xf32> -> vector<2x32xf32>
    %48 = arith.addf %46, %47 : vector<2x32xf32>
    %49 = math.tanh %48 : vector<2x32xf32>
    %50 = tpu.concatenate %49, %43 in 1 : vector<2x32xf32>, vector<2x32xf32> -> vector<2x64xf32>
    %cst_31 = arith.constant dense<0.000000e+00> : vector<2x32xf32>
    %51 = tpu.matmul %50, %1, %cst_31 {dimension_numbers = #tpu.dot_dimension_numbers<[1], [0], [0], [1], [0, 0, 1, 1], [], []>} : vector<2x64xf32>, vector<64x32xf32>, vector<2x32xf32> -> vector<2x32xf32>
    %52 = vector.broadcast %2 : vector<1x32xf32> to vector<2x32xf32>
    %53 = arith.addf %51, %52 : vector<2x32xf32>
    %54 = math.tanh %53 : vector<2x32xf32>
    %c6 = arith.constant 6 : index
    %c0_32 = arith.constant 0 : index
    %55 = vector.load %arg12[%c6, %c0_32] : memref<16x32xf32, #tpu.memory_space<vmem>>, vector<2x32xf32>
    tpu.vector_store %arg12[%c6, %c0_32], %49 {strides = array<i32>} : memref<16x32xf32, #tpu.memory_space<vmem>>, vector<2x32xf32>,
    %c6_33 = arith.constant 6 : index
    %c0_34 = arith.constant 0 : index
    %56 = vector.load %arg13[%c6_33, %c0_34] : memref<16x32xf32, #tpu.memory_space<vmem>>, vector<2x32xf32>
    tpu.vector_store %arg13[%c6_33, %c0_34], %54 {strides = array<i32>} : memref<16x32xf32, #tpu.memory_space<vmem>>, vector<2x32xf32>,
    %57 = vector.extract_strided_slice %10 {offsets = [8, 0], sizes = [2, 32], strides = [1, 1]} : vector<16x32xf32> to vector<2x32xf32>
    %cst_35 = arith.constant dense<0.000000e+00> : vector<2x32xf32>
    %58 = tpu.matmul %49, %0, %cst_35 {dimension_numbers = #tpu.dot_dimension_numbers<[1], [0], [0], [1], [0, 0, 1, 1], [], []>} : vector<2x32xf32>, vector<32x32xf32>, vector<2x32xf32> -> vector<2x32xf32>
    %59 = arith.addf %57, %58 : vector<2x32xf32>
    %60 = math.tanh %59 : vector<2x32xf32>
    %61 = tpu.concatenate %60, %54 in 1 : vector<2x32xf32>, vector<2x32xf32> -> vector<2x64xf32>
    %cst_36 = arith.constant dense<0.000000e+00> : vector<2x32xf32>
    %62 = tpu.matmul %61, %1, %cst_36 {dimension_numbers = #tpu.dot_dimension_numbers<[1], [0], [0], [1], [0, 0, 1, 1], [], []>} : vector<2x64xf32>, vector<64x32xf32>, vector<2x32xf32> -> vector<2x32xf32>
    %63 = vector.broadcast %2 : vector<1x32xf32> to vector<2x32xf32>
    %64 = arith.addf %62, %63 : vector<2x32xf32>
    %65 = math.tanh %64 : vector<2x32xf32>
    %c8 = arith.constant 8 : index
    %c0_37 = arith.constant 0 : index
    %66 = vector.load %arg12[%c8, %c0_37] : memref<16x32xf32, #tpu.memory_space<vmem>>, vector<2x32xf32>
    tpu.vector_store %arg12[%c8, %c0_37], %60 {strides = array<i32>} : memref<16x32xf32, #tpu.memory_space<vmem>>, vector<2x32xf32>,
    %c8_38 = arith.constant 8 : index
    %c0_39 = arith.constant 0 : index
    %67 = vector.load %arg13[%c8_38, %c0_39] : memref<16x32xf32, #tpu.memory_space<vmem>>, vector<2x32xf32>
    tpu.vector_store %arg13[%c8_38, %c0_39], %65 {strides = array<i32>} : memref<16x32xf32, #tpu.memory_space<vmem>>, vector<2x32xf32>,
    %68 = vector.extract_strided_slice %10 {offsets = [10, 0], sizes = [2, 32], strides = [1, 1]} : vector<16x32xf32> to vector<2x32xf32>
    %cst_40 = arith.constant dense<0.000000e+00> : vector<2x32xf32>
    %69 = tpu.matmul %60, %0, %cst_40 {dimension_numbers = #tpu.dot_dimension_numbers<[1], [0], [0], [1], [0, 0, 1, 1], [], []>} : vector<2x32xf32>, vector<32x32xf32>, vector<2x32xf32> -> vector<2x32xf32>
    %70 = arith.addf %68, %69 : vector<2x32xf32>
    %71 = math.tanh %70 : vector<2x32xf32>
    %72 = tpu.concatenate %71, %65 in 1 : vector<2x32xf32>, vector<2x32xf32> -> vector<2x64xf32>
    %cst_41 = arith.constant dense<0.000000e+00> : vector<2x32xf32>
    %73 = tpu.matmul %72, %1, %cst_41 {dimension_numbers = #tpu.dot_dimension_numbers<[1], [0], [0], [1], [0, 0, 1, 1], [], []>} : vector<2x64xf32>, vector<64x32xf32>, vector<2x32xf32> -> vector<2x32xf32>
    %74 = vector.broadcast %2 : vector<1x32xf32> to vector<2x32xf32>
    %75 = arith.addf %73, %74 : vector<2x32xf32>
    %76 = math.tanh %75 : vector<2x32xf32>
    %c10 = arith.constant 10 : index
    %c0_42 = arith.constant 0 : index
    %77 = vector.load %arg12[%c10, %c0_42] : memref<16x32xf32, #tpu.memory_space<vmem>>, vector<2x32xf32>
    tpu.vector_store %arg12[%c10, %c0_42], %71 {strides = array<i32>} : memref<16x32xf32, #tpu.memory_space<vmem>>, vector<2x32xf32>,
    %c10_43 = arith.constant 10 : index
    %c0_44 = arith.constant 0 : index
    %78 = vector.load %arg13[%c10_43, %c0_44] : memref<16x32xf32, #tpu.memory_space<vmem>>, vector<2x32xf32>
    tpu.vector_store %arg13[%c10_43, %c0_44], %76 {strides = array<i32>} : memref<16x32xf32, #tpu.memory_space<vmem>>, vector<2x32xf32>,
    %79 = vector.extract_strided_slice %10 {offsets = [12, 0], sizes = [2, 32], strides = [1, 1]} : vector<16x32xf32> to vector<2x32xf32>
    %cst_45 = arith.constant dense<0.000000e+00> : vector<2x32xf32>
    %80 = tpu.matmul %71, %0, %cst_45 {dimension_numbers = #tpu.dot_dimension_numbers<[1], [0], [0], [1], [0, 0, 1, 1], [], []>} : vector<2x32xf32>, vector<32x32xf32>, vector<2x32xf32> -> vector<2x32xf32>
    %81 = arith.addf %79, %80 : vector<2x32xf32>
    %82 = math.tanh %81 : vector<2x32xf32>
    %83 = tpu.concatenate %82, %76 in 1 : vector<2x32xf32>, vector<2x32xf32> -> vector<2x64xf32>
    %cst_46 = arith.constant dense<0.000000e+00> : vector<2x32xf32>
    %84 = tpu.matmul %83, %1, %cst_46 {dimension_numbers = #tpu.dot_dimension_numbers<[1], [0], [0], [1], [0, 0, 1, 1], [], []>} : vector<2x64xf32>, vector<64x32xf32>, vector<2x32xf32> -> vector<2x32xf32>
    %85 = vector.broadcast %2 : vector<1x32xf32> to vector<2x32xf32>
    %86 = arith.addf %84, %85 : vector<2x32xf32>
    %87 = math.tanh %86 : vector<2x32xf32>
    %c12 = arith.constant 12 : index
    %c0_47 = arith.constant 0 : index
    %88 = vector.load %arg12[%c12, %c0_47] : memref<16x32xf32, #tpu.memory_space<vmem>>, vector<2x32xf32>
    tpu.vector_store %arg12[%c12, %c0_47], %82 {strides = array<i32>} : memref<16x32xf32, #tpu.memory_space<vmem>>, vector<2x32xf32>,
    %c12_48 = arith.constant 12 : index
    %c0_49 = arith.constant 0 : index
    %89 = vector.load %arg13[%c12_48, %c0_49] : memref<16x32xf32, #tpu.memory_space<vmem>>, vector<2x32xf32>
    tpu.vector_store %arg13[%c12_48, %c0_49], %87 {strides = array<i32>} : memref<16x32xf32, #tpu.memory_space<vmem>>, vector<2x32xf32>,
    %90 = vector.extract_strided_slice %10 {offsets = [14, 0], sizes = [2, 32], strides = [1, 1]} : vector<16x32xf32> to vector<2x32xf32>
    %cst_50 = arith.constant dense<0.000000e+00> : vector<2x32xf32>
    %91 = tpu.matmul %82, %0, %cst_50 {dimension_numbers = #tpu.dot_dimension_numbers<[1], [0], [0], [1], [0, 0, 1, 1], [], []>} : vector<2x32xf32>, vector<32x32xf32>, vector<2x32xf32> -> vector<2x32xf32>
    %92 = arith.addf %90, %91 : vector<2x32xf32>
    %93 = math.tanh %92 : vector<2x32xf32>
    %94 = tpu.concatenate %93, %87 in 1 : vector<2x32xf32>, vector<2x32xf32> -> vector<2x64xf32>
    %cst_51 = arith.constant dense<0.000000e+00> : vector<2x32xf32>
    %95 = tpu.matmul %94, %1, %cst_51 {dimension_numbers = #tpu.dot_dimension_numbers<[1], [0], [0], [1], [0, 0, 1, 1], [], []>} : vector<2x64xf32>, vector<64x32xf32>, vector<2x32xf32> -> vector<2x32xf32>
    %96 = vector.broadcast %2 : vector<1x32xf32> to vector<2x32xf32>
    %97 = arith.addf %95, %96 : vector<2x32xf32>
    %98 = math.tanh %97 : vector<2x32xf32>
    %c14 = arith.constant 14 : index
    %c0_52 = arith.constant 0 : index
    %99 = vector.load %arg12[%c14, %c0_52] : memref<16x32xf32, #tpu.memory_space<vmem>>, vector<2x32xf32>
    tpu.vector_store %arg12[%c14, %c0_52], %93 {strides = array<i32>} : memref<16x32xf32, #tpu.memory_space<vmem>>, vector<2x32xf32>,
    %c14_53 = arith.constant 14 : index
    %c0_54 = arith.constant 0 : index
    %100 = vector.load %arg13[%c14_53, %c0_54] : memref<16x32xf32, #tpu.memory_space<vmem>>, vector<2x32xf32>
    tpu.vector_store %arg13[%c14_53, %c0_54], %98 {strides = array<i32>} : memref<16x32xf32, #tpu.memory_space<vmem>>, vector<2x32xf32>,
    %c0_55 = arith.constant 0 : index
    %c0_56 = arith.constant 0 : index
    %101 = vector.load %arg12[%c0_55, %c0_56] : memref<16x32xf32, #tpu.memory_space<vmem>>, vector<16x32xf32>
    %c0_57 = arith.constant 0 : index
    %c0_58 = arith.constant 0 : index
    %102 = vector.load %arg6[%c0_57, %c0_58] : memref<32x16xf32, #tpu.memory_space<vmem>>, vector<32x16xf32>
    %cst_59 = arith.constant dense<0.000000e+00> : vector<16x16xf32>
    %103 = tpu.matmul %101, %102, %cst_59 {dimension_numbers = #tpu.dot_dimension_numbers<[1], [0], [0], [1], [0, 0, 1, 1], [], []>} : vector<16x32xf32>, vector<32x16xf32>, vector<16x16xf32> -> vector<16x16xf32>
    %c0_60 = arith.constant 0 : index
    %c0_61 = arith.constant 0 : index
    %104 = vector.load %arg7[%c0_60, %c0_61] : memref<1x16xf32, #tpu.memory_space<vmem>>, vector<1x16xf32>
    %105 = vector.broadcast %104 : vector<1x16xf32> to vector<16x16xf32>
    %106 = arith.addf %103, %105 : vector<16x16xf32>
    %c0_62 = arith.constant 0 : index
    %c0_63 = arith.constant 0 : index
    %107 = vector.load %arg10[%c0_62, %c0_63] : memref<16x16xf32, #tpu.memory_space<vmem>>, vector<16x16xf32>
    tpu.vector_store %arg10[%c0_62, %c0_63], %106 {strides = array<i32>} : memref<16x16xf32, #tpu.memory_space<vmem>>, vector<16x16xf32>,
    %c0_64 = arith.constant 0 : index
    %c0_65 = arith.constant 0 : index
    %108 = vector.load %arg13[%c0_64, %c0_65] : memref<16x32xf32, #tpu.memory_space<vmem>>, vector<16x32xf32>
    %c0_66 = arith.constant 0 : index
    %c0_67 = arith.constant 0 : index
    %109 = vector.load %arg8[%c0_66, %c0_67] : memref<32x16xf32, #tpu.memory_space<vmem>>, vector<32x16xf32>
    %cst_68 = arith.constant dense<0.000000e+00> : vector<16x16xf32>
    %110 = tpu.matmul %108, %109, %cst_68 {dimension_numbers = #tpu.dot_dimension_numbers<[1], [0], [0], [1], [0, 0, 1, 1], [], []>} : vector<16x32xf32>, vector<32x16xf32>, vector<16x16xf32> -> vector<16x16xf32>
    %c0_69 = arith.constant 0 : index
    %c0_70 = arith.constant 0 : index
    %111 = vector.load %arg9[%c0_69, %c0_70] : memref<1x16xf32, #tpu.memory_space<vmem>>, vector<1x16xf32>
    %112 = vector.broadcast %111 : vector<1x16xf32> to vector<16x16xf32>
    %113 = arith.addf %110, %112 : vector<16x16xf32>
    %c0_71 = arith.constant 0 : index
    %c0_72 = arith.constant 0 : index
    %114 = vector.load %arg11[%c0_71, %c0_72] : memref<16x16xf32, #tpu.memory_space<vmem>>, vector<16x16xf32>
    tpu.vector_store %arg11[%c0_71, %c0_72], %113 {strides = array<i32>} : memref<16x16xf32, #tpu.memory_space<vmem>>, vector<16x16xf32>,
    return
  }
}

</mosaic_0001>

<llo_original>
// kernel: rnn_model_pallas.1
$region0: #{rnn_model_pallas.1}
  #allocation0 [shape = 'u32[]', space=smem, size = 0x4, offset = 0x4, fixed_abs, tag = 'smem constant byte address 0x4 - core index']
  #allocation1 [shape = 'u32[144,128]{1,0:T(1,128)}', space=vmem, size = 0x12000, scoped, tag = 'internal scratch']
  #allocation2 [shape = 'f32[16,32]{1,0:T(8,128)}', space=vmem, size = 0x2000, scoped, tag = 'scratch operand']
  #allocation3 [shape = 'f32[16,32]{1,0:T(8,128)}', space=vmem, size = 0x2000, scoped, tag = 'scratch operand']
  %s0 = inlined_call_operand.vmem [shape: f32[16,96], index: 0, kind: input, shape index: {}]
  %s1 = inlined_call_operand.vmem [shape: f32[96,32], index: 1, kind: input, shape index: {}]
  %s2 = inlined_call_operand.vmem [shape: f32[1,32], index: 2, kind: input, shape index: {}]
  %s3 = inlined_call_operand.vmem [shape: f32[32,32], index: 3, kind: input, shape index: {}]
  %s4 = inlined_call_operand.vmem [shape: f32[64,32], index: 4, kind: input, shape index: {}]
  %s5 = inlined_call_operand.vmem [shape: f32[1,32], index: 5, kind: input, shape index: {}]
  %s6 = inlined_call_operand.vmem [shape: f32[32,16], index: 6, kind: input, shape index: {}]
  %s7 = inlined_call_operand.vmem [shape: f32[1,16], index: 7, kind: input, shape index: {}]
  %s8 = inlined_call_operand.vmem [shape: f32[32,16], index: 8, kind: input, shape index: {}]
  %s9 = inlined_call_operand.vmem [shape: f32[1,16], index: 9, kind: input, shape index: {}]
  %s10 = inlined_call_operand.vmem [shape: f32[16,16], index: 10, kind: output, shape index: {0}]
  %s11 = inlined_call_operand.vmem [shape: f32[16,16], index: 11, kind: output, shape index: {1}]
  %12 = xla_tuple %s10, %s11
  %s13 = sld [smem:[#allocation0]]
  $region58: #{rnn_model_pallas.1} parent=0
    _
  %s15 = ssub.s32 1, %s13
  %s16 = scalar_select 0, %s15, %s13
  // Predicated region
  $region2: #{rnn_model_pallas.1} parent=0 // pred_check
    _
  $region3: #{rnn_model_pallas.1} parent=0 // pred_check_branch
    %18 = sbr.rel (0) target = $region5
  $region4: #{rnn_model_pallas.1} parent=0 // pred_region
    _
  $region5: #{rnn_model_pallas.1} parent=0 // pred_fallthru
    _
  // Predicated region
  $region6: #{rnn_model_pallas.1} parent=0 // pred_check
    _
  $region7: #{rnn_model_pallas.1} parent=0 // pred_check_branch
    %20 = sbr.rel (0) target = $region9
  $region8: #{rnn_model_pallas.1} parent=0 // pred_region
    _
  $region9: #{rnn_model_pallas.1} parent=0 // pred_fallthru
    _
  // Predicated region
  $region10: #{rnn_model_pallas.1} parent=0 // pred_check
    _
  $region11: #{rnn_model_pallas.1} parent=0 // pred_check_branch
    %22 = sbr.rel (0) target = $region13
  $region12: #{rnn_model_pallas.1} parent=0 // pred_region
    _
  $region13: #{rnn_model_pallas.1} parent=0 // pred_fallthru
    _
  // Predicated region
  $region14: #{rnn_model_pallas.1} parent=0 // pred_check
    _
  $region15: #{rnn_model_pallas.1} parent=0 // pred_check_branch
    %24 = sbr.rel (0) target = $region17
  $region16: #{rnn_model_pallas.1} parent=0 // pred_region
    _
  $region17: #{rnn_model_pallas.1} parent=0 // pred_fallthru
    _
  // Predicated region
  $region18: #{rnn_model_pallas.1} parent=0 // pred_check
    _
  $region19: #{rnn_model_pallas.1} parent=0 // pred_check_branch
    %26 = sbr.rel (0) target = $region21
  $region20: #{rnn_model_pallas.1} parent=0 // pred_region
    _
  $region21: #{rnn_model_pallas.1} parent=0 // pred_fallthru
    _
  // Predicated region
  $region22: #{rnn_model_pallas.1} parent=0 // pred_check
    _
  $region23: #{rnn_model_pallas.1} parent=0 // pred_check_branch
    %28 = sbr.rel (0) target = $region25
  $region24: #{rnn_model_pallas.1} parent=0 // pred_region
    _
  $region25: #{rnn_model_pallas.1} parent=0 // pred_fallthru
    _
  // Predicated region
  $region26: #{rnn_model_pallas.1} parent=0 // pred_check
    _
  $region27: #{rnn_model_pallas.1} parent=0 // pred_check_branch
    %30 = sbr.rel (0) target = $region29
  $region28: #{rnn_model_pallas.1} parent=0 // pred_region
    _
  $region29: #{rnn_model_pallas.1} parent=0 // pred_fallthru
    _
  // Predicated region
  $region30: #{rnn_model_pallas.1} parent=0 // pred_check
    _
  $region31: #{rnn_model_pallas.1} parent=0 // pred_check_branch
    %32 = sbr.rel (0) target = $region33
  $region32: #{rnn_model_pallas.1} parent=0 // pred_region
    _
  $region33: #{rnn_model_pallas.1} parent=0 // pred_fallthru
    _
  // Predicated region
  $region34: #{rnn_model_pallas.1} parent=0 // pred_check
    _
  $region35: #{rnn_model_pallas.1} parent=0 // pred_check_branch
    %34 = sbr.rel (0) target = $region37
  $region36: #{rnn_model_pallas.1} parent=0 // pred_region
    _
  $region37: #{rnn_model_pallas.1} parent=0 // pred_fallthru
    _
  // Predicated region
  $region38: #{rnn_model_pallas.1} parent=0 // pred_check
    _
  $region39: #{rnn_model_pallas.1} parent=0 // pred_check_branch
    %36 = sbr.rel (0) target = $region41
  $region40: #{rnn_model_pallas.1} parent=0 // pred_region
    _
  $region41: #{rnn_model_pallas.1} parent=0 // pred_fallthru
    _
  %v37 = vld [vmem:[%s3] sm:$0xff]
  %v38 = vld [vmem:[%s3 + $0x8] sm:$0xff]
  %v39 = vld [vmem:[%s3 + $0x10] sm:$0xff]
  %v40 = vld [vmem:[%s3 + $0x18] sm:$0xff]
  %v41 = vld [vmem:[%s4] sm:$0xff]
  %v42 = vld [vmem:[%s4 + $0x8] sm:$0xff]
  %v43 = vld [vmem:[%s4 + $0x10] sm:$0xff]
  %v44 = vld [vmem:[%s4 + $0x18] sm:$0xff]
  %v45 = vld [vmem:[%s4 + $0x20] sm:$0xff]
  %v46 = vld [vmem:[%s4 + $0x28] sm:$0xff]
  %v47 = vld [vmem:[%s4 + $0x30] sm:$0xff]
  %v48 = vld [vmem:[%s4 + $0x38] sm:$0xff]
  %v49 = vld [vmem:[%s5] sm:$0x1]
  %v50 = vld [vmem:[%s0] sm:$0xff]
  %v51 = vld [vmem:[%s0 + $0x8] sm:$0xff]
  %v52 = vmax.f32 %v50, 0.0
  %v53 = vmax.f32 %v51, 0.0
  %v54 = vld [vmem:[%s1] sm:$0xff]
  %v55 = vld [vmem:[%s1 + $0x8] sm:$0xff]
  %v56 = vld [vmem:[%s1 + $0x10] sm:$0xff]
  %v57 = vld [vmem:[%s1 + $0x18] sm:$0xff]
  %v58 = vld [vmem:[%s1 + $0x20] sm:$0xff]
  %v59 = vld [vmem:[%s1 + $0x28] sm:$0xff]
  %v60 = vld [vmem:[%s1 + $0x30] sm:$0xff]
  %v61 = vld [vmem:[%s1 + $0x38] sm:$0xff]
  %v62 = vld [vmem:[%s1 + $0x40] sm:$0xff]
  %v63 = vld [vmem:[%s1 + $0x48] sm:$0xff]
  %v64 = vld [vmem:[%s1 + $0x50] sm:$0xff]
  %v65 = vld [vmem:[%s1 + $0x58] sm:$0xff]
  %v66 = vld [vmem:[%s2] sm:$0x1]
  %v68 = vlaneseq
  %v69 = vshrl.u32 %v68, 7
  %v70 = vsub.s32 0, %v69
  %v71 = vrot.slane %v66, %v70
  %vm73 = vcmask 785408
  %v75 = vsel %vm73, %v52, 0
  %v78 = vsel %vm73, %v53, 0
  %80 = vmatprep.subr.mxu0 0.0
  %81 = vmatpush1.msra.mxu0 %v54
  %82 = vmatprep.subr.mxu0 0.0
  %83 = vmatpush1.msra.mxu0 %v55
  %84 = vmatprep.subr.mxu0 0.0
  %85 = vmatpush1.msra.mxu0 %v56
  %86 = vmatprep.subr.mxu0 0.0
  %87 = vmatpush1.msra.mxu0 %v57
  %88 = vmatprep.subr.mxu0 0.0
  %89 = vmatpush1.msra.mxu0 %v58
  %90 = vmatprep.subr.mxu0 0.0
  %91 = vmatpush1.msra.mxu0 %v59
  %92 = vmatprep.subr.mxu0 0.0
  %93 = vmatpush1.msra.mxu0 %v60
  %94 = vmatprep.subr.mxu0 0.0
  %95 = vmatpush1.msra.mxu0 %v61
  %96 = vmatprep.subr.mxu0 0.0
  %97 = vmatpush1.msra.mxu0 %v62
  %98 = vmatprep.subr.mxu0 0.0
  %99 = vmatpush1.msra.mxu0 %v63
  %100 = vmatprep.subr.mxu0 0.0
  %101 = vmatpush1.msra.mxu0 %v64
  %102 = vmatprep.subr.mxu0 0.0
  %103 = vmatpush1.msra.mxu0 %v65
  %104 = vmatprep.subr.mxu0 0.0
  %105 = vmatpush1.msra.mxu0 0.0
  %106 = vmatprep.subr.mxu0 0.0
  %107 = vmatpush1.msra.mxu0 0.0
  %108 = vmatprep.subr.mxu0 0.0
  %109 = vmatpush1.msra.mxu0 0.0
  %110 = vmatprep.subr.mxu0 0.0
  %111 = vmatpush1.msra.mxu0 0.0
  %112 = vmatprep.subr.mxu0 0.0
  %113 = vmatpush1.msra.mxu0 0.0
  %114 = vmatprep.subr.mxu0 0.0
  %115 = vmatpush1.msra.mxu0 0.0
  %116 = vmatprep.subr.mxu0 0.0
  %117 = vmatpush1.msra.mxu0 0.0
  %118 = vmatprep.subr.mxu0 0.0
  %119 = vmatpush1.msra.mxu0 0.0
  %120 = vmatprep.subr.mxu0 0.0
  %121 = vmatpush1.msra.mxu0 0.0
  %122 = vmatprep.subr.mxu0 0.0
  %123 = vmatpush1.msra.mxu0 0.0
  %124 = vmatprep.subr.mxu0 0.0
  %125 = vmatpush1.msra.mxu0 0.0
  %126 = vmatprep.subr.mxu0 0.0
  %127 = vmatpush1.msra.mxu0 0.0
  %128 = vmatprep.subr.mxu0 0.0
  %129 = vmatpush1.msra.mxu0 0.0
  %130 = vmatprep.subr.mxu0 0.0
  %131 = vmatpush1.msra.mxu0 0.0
  %132 = vmatprep.subr.mxu0 0.0
  %133 = vmatpush1.msra.mxu0 0.0
  %134 = vmatprep.subr.mxu0 0.0
  %135 = vmatpush1.msra.mxu0 0.0
  %136 = vmatprep.subr.mxu0 0.0
  %137 = vmatpush1.msra.mxu0 0.0
  %138 = vmatprep.subr.mxu0 0.0
  %139 = vmatpush1.msra.mxu0 0.0
  %140 = vmatprep.subr.mxu0 0.0
  %141 = vmatpush1.msra.mxu0 0.0
  %142 = vmatprep.subr.mxu0 0.0
  %143 = vmatpush1.msra.mxu0 0.0
  %144 = vmatprep.mubr.f32.mxu0 0.0
  %145 = vmatmul.mubr.f32.gmra.mrb[0].mxu0 %v75
  %v146 = vpop.f32.mrb[0].mxu0
  %v147 = vadd.f32 %v71, %v146
  %v148 = vpop.f32.mrb[0].mxu0
  %149 = vmatprep.mubr.f32.mxu0 0.0
  %150 = vmatmul.mubr.f32.gmra.mrb[0].mxu0 %v78
  %v151 = vpop.f32.mrb[0].mxu0
  %v152 = vadd.f32 %v71, %v151
  %v153 = vpop.f32.mrb[0].mxu0
  %154 = vdwg.mxu0
  %vm155 = vcmask 261120
  %v157 = vsel %vm155, 0.0, 0
  %159 = vmatprep.subr.mxu0 0.0
  %160 = vmatpush1.msra.mxu0 %v37
  %161 = vmatprep.subr.mxu0 0.0
  %162 = vmatpush1.msra.mxu0 %v38
  %163 = vmatprep.subr.mxu0 0.0
  %164 = vmatpush1.msra.mxu0 %v39
  %165 = vmatprep.subr.mxu0 0.0
  %166 = vmatpush1.msra.mxu0 %v40
  %167 = vmatprep.subr.mxu0 0.0
  %168 = vmatpush1.msra.mxu0 0.0
  %169 = vmatprep.subr.mxu0 0.0
  %170 = vmatpush1.msra.mxu0 0.0
  %171 = vmatprep.subr.mxu0 0.0
  %172 = vmatpush1.msra.mxu0 0.0
  %173 = vmatprep.subr.mxu0 0.0
  %174 = vmatpush1.msra.mxu0 0.0
  %175 = vmatprep.subr.mxu0 0.0
  %176 = vmatpush1.msra.mxu0 0.0
  %177 = vmatprep.subr.mxu0 0.0
  %178 = vmatpush1.msra.mxu0 0.0
  %179 = vmatprep.subr.mxu0 0.0
  %180 = vmatpush1.msra.mxu0 0.0
  %181 = vmatprep.subr.mxu0 0.0
  %182 = vmatpush1.msra.mxu0 0.0
  %183 = vmatprep.subr.mxu0 0.0
  %184 = vmatpush1.msra.mxu0 0.0
  %185 = vmatprep.subr.mxu0 0.0
  %186 = vmatpush1.msra.mxu0 0.0
  %187 = vmatprep.subr.mxu0 0.0
  %188 = vmatpush1.msra.mxu0 0.0
  %189 = vmatprep.subr.mxu0 0.0
  %190 = vmatpush1.msra.mxu0 0.0
  %191 = vmatprep.subr.mxu0 0.0
  %192 = vmatpush1.msra.mxu0 0.0
  %193 = vmatprep.subr.mxu0 0.0
  %194 = vmatpush1.msra.mxu0 0.0
  %195 = vmatprep.subr.mxu0 0.0
  %196 = vmatpush1.msra.mxu0 0.0
  %197 = vmatprep.subr.mxu0 0.0
  %198 = vmatpush1.msra.mxu0 0.0
  %199 = vmatprep.subr.mxu0 0.0
  %200 = vmatpush1.msra.mxu0 0.0
  %201 = vmatprep.subr.mxu0 0.0
  %202 = vmatpush1.msra.mxu0 0.0
  %203 = vmatprep.subr.mxu0 0.0
  %204 = vmatpush1.msra.mxu0 0.0
  %205 = vmatprep.subr.mxu0 0.0
  %206 = vmatpush1.msra.mxu0 0.0
  %207 = vmatprep.subr.mxu0 0.0
  %208 = vmatpush1.msra.mxu0 0.0
  %209 = vmatprep.subr.mxu0 0.0
  %210 = vmatpush1.msra.mxu0 0.0
  %211 = vmatprep.subr.mxu0 0.0
  %212 = vmatpush1.msra.mxu0 0.0
  %213 = vmatprep.subr.mxu0 0.0
  %214 = vmatpush1.msra.mxu0 0.0
  %215 = vmatprep.subr.mxu0 0.0
  %216 = vmatpush1.msra.mxu0 0.0
  %217 = vmatprep.subr.mxu0 0.0
  %218 = vmatpush1.msra.mxu0 0.0
  %219 = vmatprep.subr.mxu0 0.0
  %220 = vmatpush1.msra.mxu0 0.0
  %221 = vmatprep.subr.mxu0 0.0
  %222 = vmatpush1.msra.mxu0 0.0
  %223 = vmatprep.mubr.f32.mxu0 0.0
  %224 = vmatmul.mubr.f32.gmra.mrb[0].mxu0 %v157
  %v225 = vpop.f32.mrb[0].mxu0
  %v226 = vadd.f32 0.0, %v225
  %v227 = vpop.f32.mrb[0].mxu0
  %228 = vdwg.mxu0
  %v229 = vadd.f32 %v147, %v226
  %v230 = vtanh.pop %v229
  %v231 = vsel %vm155, %v230, 0.0
  %v233 = vlaneseq
  %v234 = vshrl.u32 %v233, 7
  %v235 = vsub.s32 0, %v234
  %v236 = vrot.slane %v49, %v235
  %vm238 = vcmask 523264
  %v240 = vsel %vm238, %v231, 0
  %242 = vmatprep.subr.mxu0 0.0
  %243 = vmatpush1.msra.mxu0 %v41
  %244 = vmatprep.subr.mxu0 0.0
  %245 = vmatpush1.msra.mxu0 %v42
  %246 = vmatprep.subr.mxu0 0.0
  %247 = vmatpush1.msra.mxu0 %v43
  %248 = vmatprep.subr.mxu0 0.0
  %249 = vmatpush1.msra.mxu0 %v44
  %250 = vmatprep.subr.mxu0 0.0
  %251 = vmatpush1.msra.mxu0 %v45
  %252 = vmatprep.subr.mxu0 0.0
  %253 = vmatpush1.msra.mxu0 %v46
  %254 = vmatprep.subr.mxu0 0.0
  %255 = vmatpush1.msra.mxu0 %v47
  %256 = vmatprep.subr.mxu0 0.0
  %257 = vmatpush1.msra.mxu0 %v48
  %258 = vmatprep.subr.mxu0 0.0
  %259 = vmatpush1.msra.mxu0 0.0
  %260 = vmatprep.subr.mxu0 0.0
  %261 = vmatpush1.msra.mxu0 0.0
  %262 = vmatprep.subr.mxu0 0.0
  %263 = vmatpush1.msra.mxu0 0.0
  %264 = vmatprep.subr.mxu0 0.0
  %265 = vmatpush1.msra.mxu0 0.0
  %266 = vmatprep.subr.mxu0 0.0
  %267 = vmatpush1.msra.mxu0 0.0
  %268 = vmatprep.subr.mxu0 0.0
  %269 = vmatpush1.msra.mxu0 0.0
  %270 = vmatprep.subr.mxu0 0.0
  %271 = vmatpush1.msra.mxu0 0.0
  %272 = vmatprep.subr.mxu0 0.0
  %273 = vmatpush1.msra.mxu0 0.0
  %274 = vmatprep.subr.mxu0 0.0
  %275 = vmatpush1.msra.mxu0 0.0
  %276 = vmatprep.subr.mxu0 0.0
  %277 = vmatpush1.msra.mxu0 0.0
  %278 = vmatprep.subr.mxu0 0.0
  %279 = vmatpush1.msra.mxu0 0.0
  %280 = vmatprep.subr.mxu0 0.0
  %281 = vmatpush1.msra.mxu0 0.0
  %282 = vmatprep.subr.mxu0 0.0
  %283 = vmatpush1.msra.mxu0 0.0
  %284 = vmatprep.subr.mxu0 0.0
  %285 = vmatpush1.msra.mxu0 0.0
  %286 = vmatprep.subr.mxu0 0.0
  %287 = vmatpush1.msra.mxu0 0.0
  %288 = vmatprep.subr.mxu0 0.0
  %289 = vmatpush1.msra.mxu0 0.0
  %290 = vmatprep.subr.mxu0 0.0
  %291 = vmatpush1.msra.mxu0 0.0
  %292 = vmatprep.subr.mxu0 0.0
  %293 = vmatpush1.msra.mxu0 0.0
  %294 = vmatprep.subr.mxu0 0.0
  %295 = vmatpush1.msra.mxu0 0.0
  %296 = vmatprep.subr.mxu0 0.0
  %297 = vmatpush1.msra.mxu0 0.0
  %298 = vmatprep.subr.mxu0 0.0
  %299 = vmatpush1.msra.mxu0 0.0
  %300 = vmatprep.subr.mxu0 0.0
  %301 = vmatpush1.msra.mxu0 0.0
  %302 = vmatprep.subr.mxu0 0.0
  %303 = vmatpush1.msra.mxu0 0.0
  %304 = vmatprep.subr.mxu0 0.0
  %305 = vmatpush1.msra.mxu0 0.0
  %306 = vmatprep.mubr.f32.mxu0 0.0
  %307 = vmatmul.mubr.f32.gmra.mrb[0].mxu0 %v240
  %v308 = vpop.f32.mrb[0].mxu0
  %v309 = vadd.f32 %v236, %v308
  %v310 = vpop.f32.mrb[0].mxu0
  %311 = vdwg.mxu0
  %v312 = vtanh.pop %v309
  %vm313 = vcmask 254976
  %314 = vst.msk [vmem:[#allocation2] sm:$0x3] %vm313, %v230
  %315 = vst.msk [vmem:[#allocation3] sm:$0x3] %vm313, %v312
  %v317 = vsel %vm155, %v230, 0
  %319 = vmatprep.subr.mxu0 0.0
  %320 = vmatpush1.msra.mxu0 %v37
  %321 = vmatprep.subr.mxu0 0.0
  %322 = vmatpush1.msra.mxu0 %v38
  %323 = vmatprep.subr.mxu0 0.0
  %324 = vmatpush1.msra.mxu0 %v39
  %325 = vmatprep.subr.mxu0 0.0
  %326 = vmatpush1.msra.mxu0 %v40
  %327 = vmatprep.subr.mxu0 0.0
  %328 = vmatpush1.msra.mxu0 0.0
  %329 = vmatprep.subr.mxu0 0.0
  %330 = vmatpush1.msra.mxu0 0.0
  %331 = vmatprep.subr.mxu0 0.0
  %332 = vmatpush1.msra.mxu0 0.0
  %333 = vmatprep.subr.mxu0 0.0
  %334 = vmatpush1.msra.mxu0 0.0
  %335 = vmatprep.subr.mxu0 0.0
  %336 = vmatpush1.msra.mxu0 0.0
  %337 = vmatprep.subr.mxu0 0.0
  %338 = vmatpush1.msra.mxu0 0.0
  %339 = vmatprep.subr.mxu0 0.0
  %340 = vmatpush1.msra.mxu0 0.0
  %341 = vmatprep.subr.mxu0 0.0
  %342 = vmatpush1.msra.mxu0 0.0
  %343 = vmatprep.subr.mxu0 0.0
  %344 = vmatpush1.msra.mxu0 0.0
  %345 = vmatprep.subr.mxu0 0.0
  %346 = vmatpush1.msra.mxu0 0.0
  %347 = vmatprep.subr.mxu0 0.0
  %348 = vmatpush1.msra.mxu0 0.0
  %349 = vmatprep.subr.mxu0 0.0
  %350 = vmatpush1.msra.mxu0 0.0
  %351 = vmatprep.subr.mxu0 0.0
  %352 = vmatpush1.msra.mxu0 0.0
  %353 = vmatprep.subr.mxu0 0.0
  %354 = vmatpush1.msra.mxu0 0.0
  %355 = vmatprep.subr.mxu0 0.0
  %356 = vmatpush1.msra.mxu0 0.0
  %357 = vmatprep.subr.mxu0 0.0
  %358 = vmatpush1.msra.mxu0 0.0
  %359 = vmatprep.subr.mxu0 0.0
  %360 = vmatpush1.msra.mxu0 0.0
  %361 = vmatprep.subr.mxu0 0.0
  %362 = vmatpush1.msra.mxu0 0.0
  %363 = vmatprep.subr.mxu0 0.0
  %364 = vmatpush1.msra.mxu0 0.0
  %365 = vmatprep.subr.mxu0 0.0
  %366 = vmatpush1.msra.mxu0 0.0
  %367 = vmatprep.subr.mxu0 0.0
  %368 = vmatpush1.msra.mxu0 0.0
  %369 = vmatprep.subr.mxu0 0.0
  %370 = vmatpush1.msra.mxu0 0.0
  %371 = vmatprep.subr.mxu0 0.0
  %372 = vmatpush1.msra.mxu0 0.0
  %373 = vmatprep.subr.mxu0 0.0
  %374 = vmatpush1.msra.mxu0 0.0
  %375 = vmatprep.subr.mxu0 0.0
  %376 = vmatpush1.msra.mxu0 0.0
  %377 = vmatprep.subr.mxu0 0.0
  %378 = vmatpush1.msra.mxu0 0.0
  %379 = vmatprep.subr.mxu0 0.0
  %380 = vmatpush1.msra.mxu0 0.0
  %381 = vmatprep.subr.mxu0 0.0
  %382 = vmatpush1.msra.mxu0 0.0
  %383 = vmatprep.mubr.f32.mxu0 0.0
  %384 = vmatmul.mubr.f32.gmra.mrb[0].mxu0 %v317
  %v385 = vpop.f32.mrb[0].mxu0
  %v386 = vadd.f32 0.0, %v385
  %v387 = vpop.f32.mrb[0].mxu0
  %388 = vdwg.mxu0
  %v390 = vrot.slane %v386, 6
  %v392 = vadd.f32 %v147, %v390
  %v393 = vtanh.pop %v392
  %v395 = vrot.slane %v312, 6
  %396 = vrot.lane.b32.xlu0 %v395, 32
  %v397 = vpop.permute.xlu0 %396
  %v399 = vsel %vm155, %v393, %v397
  %v401 = vrot.slane %v399, 2
  %v402 = vsel %vm238, %v401, 0
  %404 = vmatprep.subr.mxu0 0.0
  %405 = vmatpush1.msra.mxu0 %v41
  %406 = vmatprep.subr.mxu0 0.0
  %407 = vmatpush1.msra.mxu0 %v42
  %408 = vmatprep.subr.mxu0 0.0
  %409 = vmatpush1.msra.mxu0 %v43
  %410 = vmatprep.subr.mxu0 0.0
  %411 = vmatpush1.msra.mxu0 %v44
  %412 = vmatprep.subr.mxu0 0.0
  %413 = vmatpush1.msra.mxu0 %v45
  %414 = vmatprep.subr.mxu0 0.0
  %415 = vmatpush1.msra.mxu0 %v46
  %416 = vmatprep.subr.mxu0 0.0
  %417 = vmatpush1.msra.mxu0 %v47
  %418 = vmatprep.subr.mxu0 0.0
  %419 = vmatpush1.msra.mxu0 %v48
  %420 = vmatprep.subr.mxu0 0.0
  %421 = vmatpush1.msra.mxu0 0.0
  %422 = vmatprep.subr.mxu0 0.0
  %423 = vmatpush1.msra.mxu0 0.0
  %424 = vmatprep.subr.mxu0 0.0
  %425 = vmatpush1.msra.mxu0 0.0
  %426 = vmatprep.subr.mxu0 0.0
  %427 = vmatpush1.msra.mxu0 0.0
  %428 = vmatprep.subr.mxu0 0.0
  %429 = vmatpush1.msra.mxu0 0.0
  %430 = vmatprep.subr.mxu0 0.0
  %431 = vmatpush1.msra.mxu0 0.0
  %432 = vmatprep.subr.mxu0 0.0
  %433 = vmatpush1.msra.mxu0 0.0
  %434 = vmatprep.subr.mxu0 0.0
  %435 = vmatpush1.msra.mxu0 0.0
  %436 = vmatprep.subr.mxu0 0.0
  %437 = vmatpush1.msra.mxu0 0.0
  %438 = vmatprep.subr.mxu0 0.0
  %439 = vmatpush1.msra.mxu0 0.0
  %440 = vmatprep.subr.mxu0 0.0
  %441 = vmatpush1.msra.mxu0 0.0
  %442 = vmatprep.subr.mxu0 0.0
  %443 = vmatpush1.msra.mxu0 0.0
  %444 = vmatprep.subr.mxu0 0.0
  %445 = vmatpush1.msra.mxu0 0.0
  %446 = vmatprep.subr.mxu0 0.0
  %447 = vmatpush1.msra.mxu0 0.0
  %448 = vmatprep.subr.mxu0 0.0
  %449 = vmatpush1.msra.mxu0 0.0
  %450 = vmatprep.subr.mxu0 0.0
  %451 = vmatpush1.msra.mxu0 0.0
  %452 = vmatprep.subr.mxu0 0.0
  %453 = vmatpush1.msra.mxu0 0.0
  %454 = vmatprep.subr.mxu0 0.0
  %455 = vmatpush1.msra.mxu0 0.0
  %456 = vmatprep.subr.mxu0 0.0
  %457 = vmatpush1.msra.mxu0 0.0
  %458 = vmatprep.subr.mxu0 0.0
  %459 = vmatpush1.msra.mxu0 0.0
  %460 = vmatprep.subr.mxu0 0.0
  %461 = vmatpush1.msra.mxu0 0.0
  %462 = vmatprep.subr.mxu0 0.0
  %463 = vmatpush1.msra.mxu0 0.0
  %464 = vmatprep.subr.mxu0 0.0
  %465 = vmatpush1.msra.mxu0 0.0
  %466 = vmatprep.subr.mxu0 0.0
  %467 = vmatpush1.msra.mxu0 0.0
  %468 = vmatprep.mubr.f32.mxu0 0.0
  %469 = vmatmul.mubr.f32.gmra.mrb[0].mxu0 %v402
  %v470 = vpop.f32.mrb[0].mxu0
  %v471 = vadd.f32 %v236, %v470
  %v472 = vpop.f32.mrb[0].mxu0
  %473 = vdwg.mxu0
  %v474 = vtanh.pop %v471
  %vm475 = vcmask 257026
  %476 = vst.msk [vmem:[#allocation2] sm:$0xc] %vm475, %v393
  %477 = vst.msk [vmem:[#allocation3 + $0x2] sm:$0x3] %vm313, %v474
  %v479 = vrot.slane %v393, 2
  %v480 = vsel %vm155, %v479, 0
  %482 = vmatprep.subr.mxu0 0.0
  %483 = vmatpush1.msra.mxu0 %v37
  %484 = vmatprep.subr.mxu0 0.0
  %485 = vmatpush1.msra.mxu0 %v38
  %486 = vmatprep.subr.mxu0 0.0
  %487 = vmatpush1.msra.mxu0 %v39
  %488 = vmatprep.subr.mxu0 0.0
  %489 = vmatpush1.msra.mxu0 %v40
  %490 = vmatprep.subr.mxu0 0.0
  %491 = vmatpush1.msra.mxu0 0.0
  %492 = vmatprep.subr.mxu0 0.0
  %493 = vmatpush1.msra.mxu0 0.0
  %494 = vmatprep.subr.mxu0 0.0
  %495 = vmatpush1.msra.mxu0 0.0
  %496 = vmatprep.subr.mxu0 0.0
  %497 = vmatpush1.msra.mxu0 0.0
  %498 = vmatprep.subr.mxu0 0.0
  %499 = vmatpush1.msra.mxu0 0.0
  %500 = vmatprep.subr.mxu0 0.0
  %501 = vmatpush1.msra.mxu0 0.0
  %502 = vmatprep.subr.mxu0 0.0
  %503 = vmatpush1.msra.mxu0 0.0
  %504 = vmatprep.subr.mxu0 0.0
  %505 = vmatpush1.msra.mxu0 0.0
  %506 = vmatprep.subr.mxu0 0.0
  %507 = vmatpush1.msra.mxu0 0.0
  %508 = vmatprep.subr.mxu0 0.0
  %509 = vmatpush1.msra.mxu0 0.0
  %510 = vmatprep.subr.mxu0 0.0
  %511 = vmatpush1.msra.mxu0 0.0
  %512 = vmatprep.subr.mxu0 0.0
  %513 = vmatpush1.msra.mxu0 0.0
  %514 = vmatprep.subr.mxu0 0.0
  %515 = vmatpush1.msra.mxu0 0.0
  %516 = vmatprep.subr.mxu0 0.0
  %517 = vmatpush1.msra.mxu0 0.0
  %518 = vmatprep.subr.mxu0 0.0
  %519 = vmatpush1.msra.mxu0 0.0
  %520 = vmatprep.subr.mxu0 0.0
  %521 = vmatpush1.msra.mxu0 0.0
  %522 = vmatprep.subr.mxu0 0.0
  %523 = vmatpush1.msra.mxu0 0.0
  %524 = vmatprep.subr.mxu0 0.0
  %525 = vmatpush1.msra.mxu0 0.0
  %526 = vmatprep.subr.mxu0 0.0
  %527 = vmatpush1.msra.mxu0 0.0
  %528 = vmatprep.subr.mxu0 0.0
  %529 = vmatpush1.msra.mxu0 0.0
  %530 = vmatprep.subr.mxu0 0.0
  %531 = vmatpush1.msra.mxu0 0.0
  %532 = vmatprep.subr.mxu0 0.0
  %533 = vmatpush1.msra.mxu0 0.0
  %534 = vmatprep.subr.mxu0 0.0
  %535 = vmatpush1.msra.mxu0 0.0
  %536 = vmatprep.subr.mxu0 0.0
  %537 = vmatpush1.msra.mxu0 0.0
  %538 = vmatprep.subr.mxu0 0.0
  %539 = vmatpush1.msra.mxu0 0.0
  %540 = vmatprep.subr.mxu0 0.0
  %541 = vmatpush1.msra.mxu0 0.0
  %542 = vmatprep.subr.mxu0 0.0
  %543 = vmatpush1.msra.mxu0 0.0
  %544 = vmatprep.subr.mxu0 0.0
  %545 = vmatpush1.msra.mxu0 0.0
  %546 = vmatprep.mubr.f32.mxu0 0.0
  %547 = vmatmul.mubr.f32.gmra.mrb[0].mxu0 %v480
  %v548 = vpop.f32.mrb[0].mxu0
  %v549 = vadd.f32 0.0, %v548
  %v550 = vpop.f32.mrb[0].mxu0
  %551 = vdwg.mxu0
  %v553 = vrot.slane %v549, 4
  %v555 = vadd.f32 %v147, %v553
  %v556 = vtanh.pop %v555
  %v558 = vrot.slane %v474, 4
  %559 = vrot.lane.b32.xlu0 %v558, 32
  %v560 = vpop.permute.xlu0 %559
  %v562 = vsel %vm155, %v556, %v560
  %v564 = vrot.slane %v562, 4
  %v565 = vsel %vm238, %v564, 0
  %567 = vmatprep.subr.mxu0 0.0
  %568 = vmatpush1.msra.mxu0 %v41
  %569 = vmatprep.subr.mxu0 0.0
  %570 = vmatpush1.msra.mxu0 %v42
  %571 = vmatprep.subr.mxu0 0.0
  %572 = vmatpush1.msra.mxu0 %v43
  %573 = vmatprep.subr.mxu0 0.0
  %574 = vmatpush1.msra.mxu0 %v44
  %575 = vmatprep.subr.mxu0 0.0
  %576 = vmatpush1.msra.mxu0 %v45
  %577 = vmatprep.subr.mxu0 0.0
  %578 = vmatpush1.msra.mxu0 %v46
  %579 = vmatprep.subr.mxu0 0.0
  %580 = vmatpush1.msra.mxu0 %v47
  %581 = vmatprep.subr.mxu0 0.0
  %582 = vmatpush1.msra.mxu0 %v48
  %583 = vmatprep.subr.mxu0 0.0
  %584 = vmatpush1.msra.mxu0 0.0
  %585 = vmatprep.subr.mxu0 0.0
  %586 = vmatpush1.msra.mxu0 0.0
  %587 = vmatprep.subr.mxu0 0.0
  %588 = vmatpush1.msra.mxu0 0.0
  %589 = vmatprep.subr.mxu0 0.0
  %590 = vmatpush1.msra.mxu0 0.0
  %591 = vmatprep.subr.mxu0 0.0
  %592 = vmatpush1.msra.mxu0 0.0
  %593 = vmatprep.subr.mxu0 0.0
  %594 = vmatpush1.msra.mxu0 0.0
  %595 = vmatprep.subr.mxu0 0.0
  %596 = vmatpush1.msra.mxu0 0.0
  %597 = vmatprep.subr.mxu0 0.0
  %598 = vmatpush1.msra.mxu0 0.0
  %599 = vmatprep.subr.mxu0 0.0
  %600 = vmatpush1.msra.mxu0 0.0
  %601 = vmatprep.subr.mxu0 0.0
  %602 = vmatpush1.msra.mxu0 0.0
  %603 = vmatprep.subr.mxu0 0.0
  %604 = vmatpush1.msra.mxu0 0.0
  %605 = vmatprep.subr.mxu0 0.0
  %606 = vmatpush1.msra.mxu0 0.0
  %607 = vmatprep.subr.mxu0 0.0
  %608 = vmatpush1.msra.mxu0 0.0
  %609 = vmatprep.subr.mxu0 0.0
  %610 = vmatpush1.msra.mxu0 0.0
  %611 = vmatprep.subr.mxu0 0.0
  %612 = vmatpush1.msra.mxu0 0.0
  %613 = vmatprep.subr.mxu0 0.0
  %614 = vmatpush1.msra.mxu0 0.0
  %615 = vmatprep.subr.mxu0 0.0
  %616 = vmatpush1.msra.mxu0 0.0
  %617 = vmatprep.subr.mxu0 0.0
  %618 = vmatpush1.msra.mxu0 0.0
  %619 = vmatprep.subr.mxu0 0.0
  %620 = vmatpush1.msra.mxu0 0.0
  %621 = vmatprep.subr.mxu0 0.0
  %622 = vmatpush1.msra.mxu0 0.0
  %623 = vmatprep.subr.mxu0 0.0
  %624 = vmatpush1.msra.mxu0 0.0
  %625 = vmatprep.subr.mxu0 0.0
  %626 = vmatpush1.msra.mxu0 0.0
  %627 = vmatprep.subr.mxu0 0.0
  %628 = vmatpush1.msra.mxu0 0.0
  %629 = vmatprep.subr.mxu0 0.0
  %630 = vmatpush1.msra.mxu0 0.0
  %631 = vmatprep.mubr.f32.mxu0 0.0
  %632 = vmatmul.mubr.f32.gmra.mrb[0].mxu0 %v565
  %v633 = vpop.f32.mrb[0].mxu0
  %v634 = vadd.f32 %v236, %v633
  %v635 = vpop.f32.mrb[0].mxu0
  %636 = vdwg.mxu0
  %v637 = vtanh.pop %v634
  %vm638 = vcmask 259076
  %639 = vst.msk [vmem:[#allocation2] sm:$0x30] %vm638, %v556
  %640 = vst.msk [vmem:[#allocation3 + $0x4] sm:$0x3] %vm313, %v637
  %v642 = vrot.slane %v556, 4
  %v643 = vsel %vm155, %v642, 0
  %645 = vmatprep.subr.mxu0 0.0
  %646 = vmatpush1.msra.mxu0 %v37
  %647 = vmatprep.subr.mxu0 0.0
  %648 = vmatpush1.msra.mxu0 %v38
  %649 = vmatprep.subr.mxu0 0.0
  %650 = vmatpush1.msra.mxu0 %v39
  %651 = vmatprep.subr.mxu0 0.0
  %652 = vmatpush1.msra.mxu0 %v40
  %653 = vmatprep.subr.mxu0 0.0
  %654 = vmatpush1.msra.mxu0 0.0
  %655 = vmatprep.subr.mxu0 0.0
  %656 = vmatpush1.msra.mxu0 0.0
  %657 = vmatprep.subr.mxu0 0.0
  %658 = vmatpush1.msra.mxu0 0.0
  %659 = vmatprep.subr.mxu0 0.0
  %660 = vmatpush1.msra.mxu0 0.0
  %661 = vmatprep.subr.mxu0 0.0
  %662 = vmatpush1.msra.mxu0 0.0
  %663 = vmatprep.subr.mxu0 0.0
  %664 = vmatpush1.msra.mxu0 0.0
  %665 = vmatprep.subr.mxu0 0.0
  %666 = vmatpush1.msra.mxu0 0.0
  %667 = vmatprep.subr.mxu0 0.0
  %668 = vmatpush1.msra.mxu0 0.0
  %669 = vmatprep.subr.mxu0 0.0
  %670 = vmatpush1.msra.mxu0 0.0
  %671 = vmatprep.subr.mxu0 0.0
  %672 = vmatpush1.msra.mxu0 0.0
  %673 = vmatprep.subr.mxu0 0.0
  %674 = vmatpush1.msra.mxu0 0.0
  %675 = vmatprep.subr.mxu0 0.0
  %676 = vmatpush1.msra.mxu0 0.0
  %677 = vmatprep.subr.mxu0 0.0
  %678 = vmatpush1.msra.mxu0 0.0
  %679 = vmatprep.subr.mxu0 0.0
  %680 = vmatpush1.msra.mxu0 0.0
  %681 = vmatprep.subr.mxu0 0.0
  %682 = vmatpush1.msra.mxu0 0.0
  %683 = vmatprep.subr.mxu0 0.0
  %684 = vmatpush1.msra.mxu0 0.0
  %685 = vmatprep.subr.mxu0 0.0
  %686 = vmatpush1.msra.mxu0 0.0
  %687 = vmatprep.subr.mxu0 0.0
  %688 = vmatpush1.msra.mxu0 0.0
  %689 = vmatprep.subr.mxu0 0.0
  %690 = vmatpush1.msra.mxu0 0.0
  %691 = vmatprep.subr.mxu0 0.0
  %692 = vmatpush1.msra.mxu0 0.0
  %693 = vmatprep.subr.mxu0 0.0
  %694 = vmatpush1.msra.mxu0 0.0
  %695 = vmatprep.subr.mxu0 0.0
  %696 = vmatpush1.msra.mxu0 0.0
  %697 = vmatprep.subr.mxu0 0.0
  %698 = vmatpush1.msra.mxu0 0.0
  %699 = vmatprep.subr.mxu0 0.0
  %700 = vmatpush1.msra.mxu0 0.0
  %701 = vmatprep.subr.mxu0 0.0
  %702 = vmatpush1.msra.mxu0 0.0
  %703 = vmatprep.subr.mxu0 0.0
  %704 = vmatpush1.msra.mxu0 0.0
  %705 = vmatprep.subr.mxu0 0.0
  %706 = vmatpush1.msra.mxu0 0.0
  %707 = vmatprep.subr.mxu0 0.0
  %708 = vmatpush1.msra.mxu0 0.0
  %709 = vmatprep.mubr.f32.mxu0 0.0
  %710 = vmatmul.mubr.f32.gmra.mrb[0].mxu0 %v643
  %v711 = vpop.f32.mrb[0].mxu0
  %v712 = vadd.f32 0.0, %v711
  %v713 = vpop.f32.mrb[0].mxu0
  %714 = vdwg.mxu0
  %v716 = vrot.slane %v712, 2
  %v718 = vadd.f32 %v147, %v716
  %v719 = vtanh.pop %v718
  %v721 = vrot.slane %v637, 2
  %722 = vrot.lane.b32.xlu0 %v721, 32
  %v723 = vpop.permute.xlu0 %722
  %v725 = vsel %vm155, %v719, %v723
  %v727 = vrot.slane %v725, 6
  %v728 = vsel %vm238, %v727, 0
  %730 = vmatprep.subr.mxu0 0.0
  %731 = vmatpush1.msra.mxu0 %v41
  %732 = vmatprep.subr.mxu0 0.0
  %733 = vmatpush1.msra.mxu0 %v42
  %734 = vmatprep.subr.mxu0 0.0
  %735 = vmatpush1.msra.mxu0 %v43
  %736 = vmatprep.subr.mxu0 0.0
  %737 = vmatpush1.msra.mxu0 %v44
  %738 = vmatprep.subr.mxu0 0.0
  %739 = vmatpush1.msra.mxu0 %v45
  %740 = vmatprep.subr.mxu0 0.0
  %741 = vmatpush1.msra.mxu0 %v46
  %742 = vmatprep.subr.mxu0 0.0
  %743 = vmatpush1.msra.mxu0 %v47
  %744 = vmatprep.subr.mxu0 0.0
  %745 = vmatpush1.msra.mxu0 %v48
  %746 = vmatprep.subr.mxu0 0.0
  %747 = vmatpush1.msra.mxu0 0.0
  %748 = vmatprep.subr.mxu0 0.0
  %749 = vmatpush1.msra.mxu0 0.0
  %750 = vmatprep.subr.mxu0 0.0
  %751 = vmatpush1.msra.mxu0 0.0
  %752 = vmatprep.subr.mxu0 0.0
  %753 = vmatpush1.msra.mxu0 0.0
  %754 = vmatprep.subr.mxu0 0.0
  %755 = vmatpush1.msra.mxu0 0.0
  %756 = vmatprep.subr.mxu0 0.0
  %757 = vmatpush1.msra.mxu0 0.0
  %758 = vmatprep.subr.mxu0 0.0
  %759 = vmatpush1.msra.mxu0 0.0
  %760 = vmatprep.subr.mxu0 0.0
  %761 = vmatpush1.msra.mxu0 0.0
  %762 = vmatprep.subr.mxu0 0.0
  %763 = vmatpush1.msra.mxu0 0.0
  %764 = vmatprep.subr.mxu0 0.0
  %765 = vmatpush1.msra.mxu0 0.0
  %766 = vmatprep.subr.mxu0 0.0
  %767 = vmatpush1.msra.mxu0 0.0
  %768 = vmatprep.subr.mxu0 0.0
  %769 = vmatpush1.msra.mxu0 0.0
  %770 = vmatprep.subr.mxu0 0.0
  %771 = vmatpush1.msra.mxu0 0.0
  %772 = vmatprep.subr.mxu0 0.0
  %773 = vmatpush1.msra.mxu0 0.0
  %774 = vmatprep.subr.mxu0 0.0
  %775 = vmatpush1.msra.mxu0 0.0
  %776 = vmatprep.subr.mxu0 0.0
  %777 = vmatpush1.msra.mxu0 0.0
  %778 = vmatprep.subr.mxu0 0.0
  %779 = vmatpush1.msra.mxu0 0.0
  %780 = vmatprep.subr.mxu0 0.0
  %781 = vmatpush1.msra.mxu0 0.0
  %782 = vmatprep.subr.mxu0 0.0
  %783 = vmatpush1.msra.mxu0 0.0
  %784 = vmatprep.subr.mxu0 0.0
  %785 = vmatpush1.msra.mxu0 0.0
  %786 = vmatprep.subr.mxu0 0.0
  %787 = vmatpush1.msra.mxu0 0.0
  %788 = vmatprep.subr.mxu0 0.0
  %789 = vmatpush1.msra.mxu0 0.0
  %790 = vmatprep.subr.mxu0 0.0
  %791 = vmatpush1.msra.mxu0 0.0
  %792 = vmatprep.subr.mxu0 0.0
  %793 = vmatpush1.msra.mxu0 0.0
  %794 = vmatprep.mubr.f32.mxu0 0.0
  %795 = vmatmul.mubr.f32.gmra.mrb[0].mxu0 %v728
  %v796 = vpop.f32.mrb[0].mxu0
  %v797 = vadd.f32 %v236, %v796
  %v798 = vpop.f32.mrb[0].mxu0
  %799 = vdwg.mxu0
  %v800 = vtanh.pop %v797
  %vm801 = vcmask 261126
  %802 = vst.msk [vmem:[#allocation2] sm:$0xc0] %vm801, %v719
  %803 = vst.msk [vmem:[#allocation3 + $0x6] sm:$0x3] %vm313, %v800
  %v805 = vrot.slane %v719, 6
  %v806 = vsel %vm155, %v805, 0
  %808 = vmatprep.subr.mxu0 0.0
  %809 = vmatpush1.msra.mxu0 %v37
  %810 = vmatprep.subr.mxu0 0.0
  %811 = vmatpush1.msra.mxu0 %v38
  %812 = vmatprep.subr.mxu0 0.0
  %813 = vmatpush1.msra.mxu0 %v39
  %814 = vmatprep.subr.mxu0 0.0
  %815 = vmatpush1.msra.mxu0 %v40
  %816 = vmatprep.subr.mxu0 0.0
  %817 = vmatpush1.msra.mxu0 0.0
  %818 = vmatprep.subr.mxu0 0.0
  %819 = vmatpush1.msra.mxu0 0.0
  %820 = vmatprep.subr.mxu0 0.0
  %821 = vmatpush1.msra.mxu0 0.0
  %822 = vmatprep.subr.mxu0 0.0
  %823 = vmatpush1.msra.mxu0 0.0
  %824 = vmatprep.subr.mxu0 0.0
  %825 = vmatpush1.msra.mxu0 0.0
  %826 = vmatprep.subr.mxu0 0.0
  %827 = vmatpush1.msra.mxu0 0.0
  %828 = vmatprep.subr.mxu0 0.0
  %829 = vmatpush1.msra.mxu0 0.0
  %830 = vmatprep.subr.mxu0 0.0
  %831 = vmatpush1.msra.mxu0 0.0
  %832 = vmatprep.subr.mxu0 0.0
  %833 = vmatpush1.msra.mxu0 0.0
  %834 = vmatprep.subr.mxu0 0.0
  %835 = vmatpush1.msra.mxu0 0.0
  %836 = vmatprep.subr.mxu0 0.0
  %837 = vmatpush1.msra.mxu0 0.0
  %838 = vmatprep.subr.mxu0 0.0
  %839 = vmatpush1.msra.mxu0 0.0
  %840 = vmatprep.subr.mxu0 0.0
  %841 = vmatpush1.msra.mxu0 0.0
  %842 = vmatprep.subr.mxu0 0.0
  %843 = vmatpush1.msra.mxu0 0.0
  %844 = vmatprep.subr.mxu0 0.0
  %845 = vmatpush1.msra.mxu0 0.0
  %846 = vmatprep.subr.mxu0 0.0
  %847 = vmatpush1.msra.mxu0 0.0
  %848 = vmatprep.subr.mxu0 0.0
  %849 = vmatpush1.msra.mxu0 0.0
  %850 = vmatprep.subr.mxu0 0.0
  %851 = vmatpush1.msra.mxu0 0.0
  %852 = vmatprep.subr.mxu0 0.0
  %853 = vmatpush1.msra.mxu0 0.0
  %854 = vmatprep.subr.mxu0 0.0
  %855 = vmatpush1.msra.mxu0 0.0
  %856 = vmatprep.subr.mxu0 0.0
  %857 = vmatpush1.msra.mxu0 0.0
  %858 = vmatprep.subr.mxu0 0.0
  %859 = vmatpush1.msra.mxu0 0.0
  %860 = vmatprep.subr.mxu0 0.0
  %861 = vmatpush1.msra.mxu0 0.0
  %862 = vmatprep.subr.mxu0 0.0
  %863 = vmatpush1.msra.mxu0 0.0
  %864 = vmatprep.subr.mxu0 0.0
  %865 = vmatpush1.msra.mxu0 0.0
  %866 = vmatprep.subr.mxu0 0.0
  %867 = vmatpush1.msra.mxu0 0.0
  %868 = vmatprep.subr.mxu0 0.0
  %869 = vmatpush1.msra.mxu0 0.0
  %870 = vmatprep.subr.mxu0 0.0
  %871 = vmatpush1.msra.mxu0 0.0
  %872 = vmatprep.mubr.f32.mxu0 0.0
  %873 = vmatmul.mubr.f32.gmra.mrb[0].mxu0 %v806
  %v874 = vpop.f32.mrb[0].mxu0
  %v875 = vadd.f32 0.0, %v874
  %v876 = vpop.f32.mrb[0].mxu0
  %877 = vdwg.mxu0
  %v878 = vadd.f32 %v152, %v875
  %v879 = vtanh.pop %v878
  %881 = vrot.lane.b32.xlu0 %v800, 32
  %v882 = vpop.permute.xlu0 %881
  %v884 = vsel %vm155, %v879, %v882
  %v886 = vsel %vm238, %v884, 0
  %888 = vmatprep.subr.mxu0 0.0
  %889 = vmatpush1.msra.mxu0 %v41
  %890 = vmatprep.subr.mxu0 0.0
  %891 = vmatpush1.msra.mxu0 %v42
  %892 = vmatprep.subr.mxu0 0.0
  %893 = vmatpush1.msra.mxu0 %v43
  %894 = vmatprep.subr.mxu0 0.0
  %895 = vmatpush1.msra.mxu0 %v44
  %896 = vmatprep.subr.mxu0 0.0
  %897 = vmatpush1.msra.mxu0 %v45
  %898 = vmatprep.subr.mxu0 0.0
  %899 = vmatpush1.msra.mxu0 %v46
  %900 = vmatprep.subr.mxu0 0.0
  %901 = vmatpush1.msra.mxu0 %v47
  %902 = vmatprep.subr.mxu0 0.0
  %903 = vmatpush1.msra.mxu0 %v48
  %904 = vmatprep.subr.mxu0 0.0
  %905 = vmatpush1.msra.mxu0 0.0
  %906 = vmatprep.subr.mxu0 0.0
  %907 = vmatpush1.msra.mxu0 0.0
  %908 = vmatprep.subr.mxu0 0.0
  %909 = vmatpush1.msra.mxu0 0.0
  %910 = vmatprep.subr.mxu0 0.0
  %911 = vmatpush1.msra.mxu0 0.0
  %912 = vmatprep.subr.mxu0 0.0
  %913 = vmatpush1.msra.mxu0 0.0
  %914 = vmatprep.subr.mxu0 0.0
  %915 = vmatpush1.msra.mxu0 0.0
  %916 = vmatprep.subr.mxu0 0.0
  %917 = vmatpush1.msra.mxu0 0.0
  %918 = vmatprep.subr.mxu0 0.0
  %919 = vmatpush1.msra.mxu0 0.0
  %920 = vmatprep.subr.mxu0 0.0
  %921 = vmatpush1.msra.mxu0 0.0
  %922 = vmatprep.subr.mxu0 0.0
  %923 = vmatpush1.msra.mxu0 0.0
  %924 = vmatprep.subr.mxu0 0.0
  %925 = vmatpush1.msra.mxu0 0.0
  %926 = vmatprep.subr.mxu0 0.0
  %927 = vmatpush1.msra.mxu0 0.0
  %928 = vmatprep.subr.mxu0 0.0
  %929 = vmatpush1.msra.mxu0 0.0
  %930 = vmatprep.subr.mxu0 0.0
  %931 = vmatpush1.msra.mxu0 0.0
  %932 = vmatprep.subr.mxu0 0.0
  %933 = vmatpush1.msra.mxu0 0.0
  %934 = vmatprep.subr.mxu0 0.0
  %935 = vmatpush1.msra.mxu0 0.0
  %936 = vmatprep.subr.mxu0 0.0
  %937 = vmatpush1.msra.mxu0 0.0
  %938 = vmatprep.subr.mxu0 0.0
  %939 = vmatpush1.msra.mxu0 0.0
  %940 = vmatprep.subr.mxu0 0.0
  %941 = vmatpush1.msra.mxu0 0.0
  %942 = vmatprep.subr.mxu0 0.0
  %943 = vmatpush1.msra.mxu0 0.0
  %944 = vmatprep.subr.mxu0 0.0
  %945 = vmatpush1.msra.mxu0 0.0
  %946 = vmatprep.subr.mxu0 0.0
  %947 = vmatpush1.msra.mxu0 0.0
  %948 = vmatprep.subr.mxu0 0.0
  %949 = vmatpush1.msra.mxu0 0.0
  %950 = vmatprep.subr.mxu0 0.0
  %951 = vmatpush1.msra.mxu0 0.0
  %952 = vmatprep.mubr.f32.mxu0 0.0
  %953 = vmatmul.mubr.f32.gmra.mrb[0].mxu0 %v886
  %v954 = vpop.f32.mrb[0].mxu0
  %v955 = vadd.f32 %v236, %v954
  %v956 = vpop.f32.mrb[0].mxu0
  %957 = vdwg.mxu0
  %v958 = vtanh.pop %v955
  %959 = vst.msk [vmem:[#allocation2 + $0x8] sm:$0x3] %vm313, %v879
  %960 = vst.msk [vmem:[#allocation3 + $0x8] sm:$0x3] %vm313, %v958
  %v962 = vsel %vm155, %v879, 0
  %964 = vmatprep.subr.mxu0 0.0
  %965 = vmatpush1.msra.mxu0 %v37
  %966 = vmatprep.subr.mxu0 0.0
  %967 = vmatpush1.msra.mxu0 %v38
  %968 = vmatprep.subr.mxu0 0.0
  %969 = vmatpush1.msra.mxu0 %v39
  %970 = vmatprep.subr.mxu0 0.0
  %971 = vmatpush1.msra.mxu0 %v40
  %972 = vmatprep.subr.mxu0 0.0
  %973 = vmatpush1.msra.mxu0 0.0
  %974 = vmatprep.subr.mxu0 0.0
  %975 = vmatpush1.msra.mxu0 0.0
  %976 = vmatprep.subr.mxu0 0.0
  %977 = vmatpush1.msra.mxu0 0.0
  %978 = vmatprep.subr.mxu0 0.0
  %979 = vmatpush1.msra.mxu0 0.0
  %980 = vmatprep.subr.mxu0 0.0
  %981 = vmatpush1.msra.mxu0 0.0
  %982 = vmatprep.subr.mxu0 0.0
  %983 = vmatpush1.msra.mxu0 0.0
  %984 = vmatprep.subr.mxu0 0.0
  %985 = vmatpush1.msra.mxu0 0.0
  %986 = vmatprep.subr.mxu0 0.0
  %987 = vmatpush1.msra.mxu0 0.0
  %988 = vmatprep.subr.mxu0 0.0
  %989 = vmatpush1.msra.mxu0 0.0
  %990 = vmatprep.subr.mxu0 0.0
  %991 = vmatpush1.msra.mxu0 0.0
  %992 = vmatprep.subr.mxu0 0.0
  %993 = vmatpush1.msra.mxu0 0.0
  %994 = vmatprep.subr.mxu0 0.0
  %995 = vmatpush1.msra.mxu0 0.0
  %996 = vmatprep.subr.mxu0 0.0
  %997 = vmatpush1.msra.mxu0 0.0
  %998 = vmatprep.subr.mxu0 0.0
  %999 = vmatpush1.msra.mxu0 0.0
  %1000 = vmatprep.subr.mxu0 0.0
  %1001 = vmatpush1.msra.mxu0 0.0
  %1002 = vmatprep.subr.mxu0 0.0
  %1003 = vmatpush1.msra.mxu0 0.0
  %1004 = vmatprep.subr.mxu0 0.0
  %1005 = vmatpush1.msra.mxu0 0.0
  %1006 = vmatprep.subr.mxu0 0.0
  %1007 = vmatpush1.msra.mxu0 0.0
  %1008 = vmatprep.subr.mxu0 0.0
  %1009 = vmatpush1.msra.mxu0 0.0
  %1010 = vmatprep.subr.mxu0 0.0
  %1011 = vmatpush1.msra.mxu0 0.0
  %1012 = vmatprep.subr.mxu0 0.0
  %1013 = vmatpush1.msra.mxu0 0.0
  %1014 = vmatprep.subr.mxu0 0.0
  %1015 = vmatpush1.msra.mxu0 0.0
  %1016 = vmatprep.subr.mxu0 0.0
  %1017 = vmatpush1.msra.mxu0 0.0
  %1018 = vmatprep.subr.mxu0 0.0
  %1019 = vmatpush1.msra.mxu0 0.0
  %1020 = vmatprep.subr.mxu0 0.0
  %1021 = vmatpush1.msra.mxu0 0.0
  %1022 = vmatprep.subr.mxu0 0.0
  %1023 = vmatpush1.msra.mxu0 0.0
  %1024 = vmatprep.subr.mxu0 0.0
  %1025 = vmatpush1.msra.mxu0 0.0
  %1026 = vmatprep.subr.mxu0 0.0
  %1027 = vmatpush1.msra.mxu0 0.0
  %1028 = vmatprep.mubr.f32.mxu0 0.0
  %1029 = vmatmul.mubr.f32.gmra.mrb[0].mxu0 %v962
  %v1030 = vpop.f32.mrb[0].mxu0
  %v1031 = vadd.f32 0.0, %v1030
  %v1032 = vpop.f32.mrb[0].mxu0
  %1033 = vdwg.mxu0
  %v1035 = vrot.slane %v1031, 6
  %v1037 = vadd.f32 %v152, %v1035
  %v1038 = vtanh.pop %v1037
  %v1040 = vrot.slane %v958, 6
  %1041 = vrot.lane.b32.xlu0 %v1040, 32
  %v1042 = vpop.permute.xlu0 %1041
  %v1044 = vsel %vm155, %v1038, %v1042
  %v1046 = vrot.slane %v1044, 2
  %v1047 = vsel %vm238, %v1046, 0
  %1049 = vmatprep.subr.mxu0 0.0
  %1050 = vmatpush1.msra.mxu0 %v41
  %1051 = vmatprep.subr.mxu0 0.0
  %1052 = vmatpush1.msra.mxu0 %v42
  %1053 = vmatprep.subr.mxu0 0.0
  %1054 = vmatpush1.msra.mxu0 %v43
  %1055 = vmatprep.subr.mxu0 0.0
  %1056 = vmatpush1.msra.mxu0 %v44
  %1057 = vmatprep.subr.mxu0 0.0
  %1058 = vmatpush1.msra.mxu0 %v45
  %1059 = vmatprep.subr.mxu0 0.0
  %1060 = vmatpush1.msra.mxu0 %v46
  %1061 = vmatprep.subr.mxu0 0.0
  %1062 = vmatpush1.msra.mxu0 %v47
  %1063 = vmatprep.subr.mxu0 0.0
  %1064 = vmatpush1.msra.mxu0 %v48
  %1065 = vmatprep.subr.mxu0 0.0
  %1066 = vmatpush1.msra.mxu0 0.0
  %1067 = vmatprep.subr.mxu0 0.0
  %1068 = vmatpush1.msra.mxu0 0.0
  %1069 = vmatprep.subr.mxu0 0.0
  %1070 = vmatpush1.msra.mxu0 0.0
  %1071 = vmatprep.subr.mxu0 0.0
  %1072 = vmatpush1.msra.mxu0 0.0
  %1073 = vmatprep.subr.mxu0 0.0
  %1074 = vmatpush1.msra.mxu0 0.0
  %1075 = vmatprep.subr.mxu0 0.0
  %1076 = vmatpush1.msra.mxu0 0.0
  %1077 = vmatprep.subr.mxu0 0.0
  %1078 = vmatpush1.msra.mxu0 0.0
  %1079 = vmatprep.subr.mxu0 0.0
  %1080 = vmatpush1.msra.mxu0 0.0
  %1081 = vmatprep.subr.mxu0 0.0
  %1082 = vmatpush1.msra.mxu0 0.0
  %1083 = vmatprep.subr.mxu0 0.0
  %1084 = vmatpush1.msra.mxu0 0.0
  %1085 = vmatprep.subr.mxu0 0.0
  %1086 = vmatpush1.msra.mxu0 0.0
  %1087 = vmatprep.subr.mxu0 0.0
  %1088 = vmatpush1.msra.mxu0 0.0
  %1089 = vmatprep.subr.mxu0 0.0
  %1090 = vmatpush1.msra.mxu0 0.0
  %1091 = vmatprep.subr.mxu0 0.0
  %1092 = vmatpush1.msra.mxu0 0.0
  %1093 = vmatprep.subr.mxu0 0.0
  %1094 = vmatpush1.msra.mxu0 0.0
  %1095 = vmatprep.subr.mxu0 0.0
  %1096 = vmatpush1.msra.mxu0 0.0
  %1097 = vmatprep.subr.mxu0 0.0
  %1098 = vmatpush1.msra.mxu0 0.0
  %1099 = vmatprep.subr.mxu0 0.0
  %1100 = vmatpush1.msra.mxu0 0.0
  %1101 = vmatprep.subr.mxu0 0.0
  %1102 = vmatpush1.msra.mxu0 0.0
  %1103 = vmatprep.subr.mxu0 0.0
  %1104 = vmatpush1.msra.mxu0 0.0
  %1105 = vmatprep.subr.mxu0 0.0
  %1106 = vmatpush1.msra.mxu0 0.0
  %1107 = vmatprep.subr.mxu0 0.0
  %1108 = vmatpush1.msra.mxu0 0.0
  %1109 = vmatprep.subr.mxu0 0.0
  %1110 = vmatpush1.msra.mxu0 0.0
  %1111 = vmatprep.subr.mxu0 0.0
  %1112 = vmatpush1.msra.mxu0 0.0
  %1113 = vmatprep.mubr.f32.mxu0 0.0
  %1114 = vmatmul.mubr.f32.gmra.mrb[0].mxu0 %v1047
  %v1115 = vpop.f32.mrb[0].mxu0
  %v1116 = vadd.f32 %v236, %v1115
  %v1117 = vpop.f32.mrb[0].mxu0
  %1118 = vdwg.mxu0
  %v1119 = vtanh.pop %v1116
  %1120 = vst.msk [vmem:[#allocation2 + $0x8] sm:$0xc] %vm475, %v1038
  %1121 = vst.msk [vmem:[#allocation3 + $0xa] sm:$0x3] %vm313, %v1119
  %v1123 = vrot.slane %v1038, 2
  %v1124 = vsel %vm155, %v1123, 0
  %1126 = vmatprep.subr.mxu0 0.0
  %1127 = vmatpush1.msra.mxu0 %v37
  %1128 = vmatprep.subr.mxu0 0.0
  %1129 = vmatpush1.msra.mxu0 %v38
  %1130 = vmatprep.subr.mxu0 0.0
  %1131 = vmatpush1.msra.mxu0 %v39
  %1132 = vmatprep.subr.mxu0 0.0
  %1133 = vmatpush1.msra.mxu0 %v40
  %1134 = vmatprep.subr.mxu0 0.0
  %1135 = vmatpush1.msra.mxu0 0.0
  %1136 = vmatprep.subr.mxu0 0.0
  %1137 = vmatpush1.msra.mxu0 0.0
  %1138 = vmatprep.subr.mxu0 0.0
  %1139 = vmatpush1.msra.mxu0 0.0
  %1140 = vmatprep.subr.mxu0 0.0
  %1141 = vmatpush1.msra.mxu0 0.0
  %1142 = vmatprep.subr.mxu0 0.0
  %1143 = vmatpush1.msra.mxu0 0.0
  %1144 = vmatprep.subr.mxu0 0.0
  %1145 = vmatpush1.msra.mxu0 0.0
  %1146 = vmatprep.subr.mxu0 0.0
  %1147 = vmatpush1.msra.mxu0 0.0
  %1148 = vmatprep.subr.mxu0 0.0
  %1149 = vmatpush1.msra.mxu0 0.0
  %1150 = vmatprep.subr.mxu0 0.0
  %1151 = vmatpush1.msra.mxu0 0.0
  %1152 = vmatprep.subr.mxu0 0.0
  %1153 = vmatpush1.msra.mxu0 0.0
  %1154 = vmatprep.subr.mxu0 0.0
  %1155 = vmatpush1.msra.mxu0 0.0
  %1156 = vmatprep.subr.mxu0 0.0
  %1157 = vmatpush1.msra.mxu0 0.0
  %1158 = vmatprep.subr.mxu0 0.0
  %1159 = vmatpush1.msra.mxu0 0.0
  %1160 = vmatprep.subr.mxu0 0.0
  %1161 = vmatpush1.msra.mxu0 0.0
  %1162 = vmatprep.subr.mxu0 0.0
  %1163 = vmatpush1.msra.mxu0 0.0
  %1164 = vmatprep.subr.mxu0 0.0
  %1165 = vmatpush1.msra.mxu0 0.0
  %1166 = vmatprep.subr.mxu0 0.0
  %1167 = vmatpush1.msra.mxu0 0.0
  %1168 = vmatprep.subr.mxu0 0.0
  %1169 = vmatpush1.msra.mxu0 0.0
  %1170 = vmatprep.subr.mxu0 0.0
  %1171 = vmatpush1.msra.mxu0 0.0
  %1172 = vmatprep.subr.mxu0 0.0
  %1173 = vmatpush1.msra.mxu0 0.0
  %1174 = vmatprep.subr.mxu0 0.0
  %1175 = vmatpush1.msra.mxu0 0.0
  %1176 = vmatprep.subr.mxu0 0.0
  %1177 = vmatpush1.msra.mxu0 0.0
  %1178 = vmatprep.subr.mxu0 0.0
  %1179 = vmatpush1.msra.mxu0 0.0
  %1180 = vmatprep.subr.mxu0 0.0
  %1181 = vmatpush1.msra.mxu0 0.0
  %1182 = vmatprep.subr.mxu0 0.0
  %1183 = vmatpush1.msra.mxu0 0.0
  %1184 = vmatprep.subr.mxu0 0.0
  %1185 = vmatpush1.msra.mxu0 0.0
  %1186 = vmatprep.subr.mxu0 0.0
  %1187 = vmatpush1.msra.mxu0 0.0
  %1188 = vmatprep.subr.mxu0 0.0
  %1189 = vmatpush1.msra.mxu0 0.0
  %1190 = vmatprep.mubr.f32.mxu0 0.0
  %1191 = vmatmul.mubr.f32.gmra.mrb[0].mxu0 %v1124
  %v1192 = vpop.f32.mrb[0].mxu0
  %v1193 = vadd.f32 0.0, %v1192
  %v1194 = vpop.f32.mrb[0].mxu0
  %1195 = vdwg.mxu0
  %v1197 = vrot.slane %v1193, 4
  %v1199 = vadd.f32 %v152, %v1197
  %v1200 = vtanh.pop %v1199
  %v1202 = vrot.slane %v1119, 4
  %1203 = vrot.lane.b32.xlu0 %v1202, 32
  %v1204 = vpop.permute.xlu0 %1203
  %v1206 = vsel %vm155, %v1200, %v1204
  %v1208 = vrot.slane %v1206, 4
  %v1209 = vsel %vm238, %v1208, 0
  %1211 = vmatprep.subr.mxu0 0.0
  %1212 = vmatpush1.msra.mxu0 %v41
  %1213 = vmatprep.subr.mxu0 0.0
  %1214 = vmatpush1.msra.mxu0 %v42
  %1215 = vmatprep.subr.mxu0 0.0
  %1216 = vmatpush1.msra.mxu0 %v43
  %1217 = vmatprep.subr.mxu0 0.0
  %1218 = vmatpush1.msra.mxu0 %v44
  %1219 = vmatprep.subr.mxu0 0.0
  %1220 = vmatpush1.msra.mxu0 %v45
  %1221 = vmatprep.subr.mxu0 0.0
  %1222 = vmatpush1.msra.mxu0 %v46
  %1223 = vmatprep.subr.mxu0 0.0
  %1224 = vmatpush1.msra.mxu0 %v47
  %1225 = vmatprep.subr.mxu0 0.0
  %1226 = vmatpush1.msra.mxu0 %v48
  %1227 = vmatprep.subr.mxu0 0.0
  %1228 = vmatpush1.msra.mxu0 0.0
  %1229 = vmatprep.subr.mxu0 0.0
  %1230 = vmatpush1.msra.mxu0 0.0
  %1231 = vmatprep.subr.mxu0 0.0
  %1232 = vmatpush1.msra.mxu0 0.0
  %1233 = vmatprep.subr.mxu0 0.0
  %1234 = vmatpush1.msra.mxu0 0.0
  %1235 = vmatprep.subr.mxu0 0.0
  %1236 = vmatpush1.msra.mxu0 0.0
  %1237 = vmatprep.subr.mxu0 0.0
  %1238 = vmatpush1.msra.mxu0 0.0
  %1239 = vmatprep.subr.mxu0 0.0
  %1240 = vmatpush1.msra.mxu0 0.0
  %1241 = vmatprep.subr.mxu0 0.0
  %1242 = vmatpush1.msra.mxu0 0.0
  %1243 = vmatprep.subr.mxu0 0.0
  %1244 = vmatpush1.msra.mxu0 0.0
  %1245 = vmatprep.subr.mxu0 0.0
  %1246 = vmatpush1.msra.mxu0 0.0
  %1247 = vmatprep.subr.mxu0 0.0
  %1248 = vmatpush1.msra.mxu0 0.0
  %1249 = vmatprep.subr.mxu0 0.0
  %1250 = vmatpush1.msra.mxu0 0.0
  %1251 = vmatprep.subr.mxu0 0.0
  %1252 = vmatpush1.msra.mxu0 0.0
  %1253 = vmatprep.subr.mxu0 0.0
  %1254 = vmatpush1.msra.mxu0 0.0
  %1255 = vmatprep.subr.mxu0 0.0
  %1256 = vmatpush1.msra.mxu0 0.0
  %1257 = vmatprep.subr.mxu0 0.0
  %1258 = vmatpush1.msra.mxu0 0.0
  %1259 = vmatprep.subr.mxu0 0.0
  %1260 = vmatpush1.msra.mxu0 0.0
  %1261 = vmatprep.subr.mxu0 0.0
  %1262 = vmatpush1.msra.mxu0 0.0
  %1263 = vmatprep.subr.mxu0 0.0
  %1264 = vmatpush1.msra.mxu0 0.0
  %1265 = vmatprep.subr.mxu0 0.0
  %1266 = vmatpush1.msra.mxu0 0.0
  %1267 = vmatprep.subr.mxu0 0.0
  %1268 = vmatpush1.msra.mxu0 0.0
  %1269 = vmatprep.subr.mxu0 0.0
  %1270 = vmatpush1.msra.mxu0 0.0
  %1271 = vmatprep.subr.mxu0 0.0
  %1272 = vmatpush1.msra.mxu0 0.0
  %1273 = vmatprep.subr.mxu0 0.0
  %1274 = vmatpush1.msra.mxu0 0.0
  %1275 = vmatprep.mubr.f32.mxu0 0.0
  %1276 = vmatmul.mubr.f32.gmra.mrb[0].mxu0 %v1209
  %v1277 = vpop.f32.mrb[0].mxu0
  %v1278 = vadd.f32 %v236, %v1277
  %v1279 = vpop.f32.mrb[0].mxu0
  %1280 = vdwg.mxu0
  %v1281 = vtanh.pop %v1278
  %1282 = vst.msk [vmem:[#allocation2 + $0x8] sm:$0x30] %vm638, %v1200
  %1283 = vst.msk [vmem:[#allocation3 + $0xc] sm:$0x3] %vm313, %v1281
  %v1285 = vrot.slane %v1200, 4
  %v1286 = vsel %vm155, %v1285, 0
  %1288 = vmatprep.subr.mxu0 0.0
  %1289 = vmatpush1.msra.mxu0 %v37
  %1290 = vmatprep.subr.mxu0 0.0
  %1291 = vmatpush1.msra.mxu0 %v38
  %1292 = vmatprep.subr.mxu0 0.0
  %1293 = vmatpush1.msra.mxu0 %v39
  %1294 = vmatprep.subr.mxu0 0.0
  %1295 = vmatpush1.msra.mxu0 %v40
  %1296 = vmatprep.subr.mxu0 0.0
  %1297 = vmatpush1.msra.mxu0 0.0
  %1298 = vmatprep.subr.mxu0 0.0
  %1299 = vmatpush1.msra.mxu0 0.0
  %1300 = vmatprep.subr.mxu0 0.0
  %1301 = vmatpush1.msra.mxu0 0.0
  %1302 = vmatprep.subr.mxu0 0.0
  %1303 = vmatpush1.msra.mxu0 0.0
  %1304 = vmatprep.subr.mxu0 0.0
  %1305 = vmatpush1.msra.mxu0 0.0
  %1306 = vmatprep.subr.mxu0 0.0
  %1307 = vmatpush1.msra.mxu0 0.0
  %1308 = vmatprep.subr.mxu0 0.0
  %1309 = vmatpush1.msra.mxu0 0.0
  %1310 = vmatprep.subr.mxu0 0.0
  %1311 = vmatpush1.msra.mxu0 0.0
  %1312 = vmatprep.subr.mxu0 0.0
  %1313 = vmatpush1.msra.mxu0 0.0
  %1314 = vmatprep.subr.mxu0 0.0
  %1315 = vmatpush1.msra.mxu0 0.0
  %1316 = vmatprep.subr.mxu0 0.0
  %1317 = vmatpush1.msra.mxu0 0.0
  %1318 = vmatprep.subr.mxu0 0.0
  %1319 = vmatpush1.msra.mxu0 0.0
  %1320 = vmatprep.subr.mxu0 0.0
  %1321 = vmatpush1.msra.mxu0 0.0
  %1322 = vmatprep.subr.mxu0 0.0
  %1323 = vmatpush1.msra.mxu0 0.0
  %1324 = vmatprep.subr.mxu0 0.0
  %1325 = vmatpush1.msra.mxu0 0.0
  %1326 = vmatprep.subr.mxu0 0.0
  %1327 = vmatpush1.msra.mxu0 0.0
  %1328 = vmatprep.subr.mxu0 0.0
  %1329 = vmatpush1.msra.mxu0 0.0
  %1330 = vmatprep.subr.mxu0 0.0
  %1331 = vmatpush1.msra.mxu0 0.0
  %1332 = vmatprep.subr.mxu0 0.0
  %1333 = vmatpush1.msra.mxu0 0.0
  %1334 = vmatprep.subr.mxu0 0.0
  %1335 = vmatpush1.msra.mxu0 0.0
  %1336 = vmatprep.subr.mxu0 0.0
  %1337 = vmatpush1.msra.mxu0 0.0
  %1338 = vmatprep.subr.mxu0 0.0
  %1339 = vmatpush1.msra.mxu0 0.0
  %1340 = vmatprep.subr.mxu0 0.0
  %1341 = vmatpush1.msra.mxu0 0.0
  %1342 = vmatprep.subr.mxu0 0.0
  %1343 = vmatpush1.msra.mxu0 0.0
  %1344 = vmatprep.subr.mxu0 0.0
  %1345 = vmatpush1.msra.mxu0 0.0
  %1346 = vmatprep.subr.mxu0 0.0
  %1347 = vmatpush1.msra.mxu0 0.0
  %1348 = vmatprep.subr.mxu0 0.0
  %1349 = vmatpush1.msra.mxu0 0.0
  %1350 = vmatprep.subr.mxu0 0.0
  %1351 = vmatpush1.msra.mxu0 0.0
  %1352 = vmatprep.mubr.f32.mxu0 0.0
  %1353 = vmatmul.mubr.f32.gmra.mrb[0].mxu0 %v1286
  %v1354 = vpop.f32.mrb[0].mxu0
  %v1355 = vadd.f32 0.0, %v1354
  %v1356 = vpop.f32.mrb[0].mxu0
  %1357 = vdwg.mxu0
  %v1359 = vrot.slane %v1355, 2
  %v1361 = vadd.f32 %v152, %v1359
  %v1362 = vtanh.pop %v1361
  %v1364 = vrot.slane %v1281, 2
  %1365 = vrot.lane.b32.xlu0 %v1364, 32
  %v1366 = vpop.permute.xlu0 %1365
  %v1368 = vsel %vm155, %v1362, %v1366
  %v1370 = vrot.slane %v1368, 6
  %v1371 = vsel %vm238, %v1370, 0
  %1373 = vmatprep.subr.mxu0 0.0
  %1374 = vmatpush1.msra.mxu0 %v41
  %1375 = vmatprep.subr.mxu0 0.0
  %1376 = vmatpush1.msra.mxu0 %v42
  %1377 = vmatprep.subr.mxu0 0.0
  %1378 = vmatpush1.msra.mxu0 %v43
  %1379 = vmatprep.subr.mxu0 0.0
  %1380 = vmatpush1.msra.mxu0 %v44
  %1381 = vmatprep.subr.mxu0 0.0
  %1382 = vmatpush1.msra.mxu0 %v45
  %1383 = vmatprep.subr.mxu0 0.0
  %1384 = vmatpush1.msra.mxu0 %v46
  %1385 = vmatprep.subr.mxu0 0.0
  %1386 = vmatpush1.msra.mxu0 %v47
  %1387 = vmatprep.subr.mxu0 0.0
  %1388 = vmatpush1.msra.mxu0 %v48
  %1389 = vmatprep.subr.mxu0 0.0
  %1390 = vmatpush1.msra.mxu0 0.0
  %1391 = vmatprep.subr.mxu0 0.0
  %1392 = vmatpush1.msra.mxu0 0.0
  %1393 = vmatprep.subr.mxu0 0.0
  %1394 = vmatpush1.msra.mxu0 0.0
  %1395 = vmatprep.subr.mxu0 0.0
  %1396 = vmatpush1.msra.mxu0 0.0
  %1397 = vmatprep.subr.mxu0 0.0
  %1398 = vmatpush1.msra.mxu0 0.0
  %1399 = vmatprep.subr.mxu0 0.0
  %1400 = vmatpush1.msra.mxu0 0.0
  %1401 = vmatprep.subr.mxu0 0.0
  %1402 = vmatpush1.msra.mxu0 0.0
  %1403 = vmatprep.subr.mxu0 0.0
  %1404 = vmatpush1.msra.mxu0 0.0
  %1405 = vmatprep.subr.mxu0 0.0
  %1406 = vmatpush1.msra.mxu0 0.0
  %1407 = vmatprep.subr.mxu0 0.0
  %1408 = vmatpush1.msra.mxu0 0.0
  %1409 = vmatprep.subr.mxu0 0.0
  %1410 = vmatpush1.msra.mxu0 0.0
  %1411 = vmatprep.subr.mxu0 0.0
  %1412 = vmatpush1.msra.mxu0 0.0
  %1413 = vmatprep.subr.mxu0 0.0
  %1414 = vmatpush1.msra.mxu0 0.0
  %1415 = vmatprep.subr.mxu0 0.0
  %1416 = vmatpush1.msra.mxu0 0.0
  %1417 = vmatprep.subr.mxu0 0.0
  %1418 = vmatpush1.msra.mxu0 0.0
  %1419 = vmatprep.subr.mxu0 0.0
  %1420 = vmatpush1.msra.mxu0 0.0
  %1421 = vmatprep.subr.mxu0 0.0
  %1422 = vmatpush1.msra.mxu0 0.0
  %1423 = vmatprep.subr.mxu0 0.0
  %1424 = vmatpush1.msra.mxu0 0.0
  %1425 = vmatprep.subr.mxu0 0.0
  %1426 = vmatpush1.msra.mxu0 0.0
  %1427 = vmatprep.subr.mxu0 0.0
  %1428 = vmatpush1.msra.mxu0 0.0
  %1429 = vmatprep.subr.mxu0 0.0
  %1430 = vmatpush1.msra.mxu0 0.0
  %1431 = vmatprep.subr.mxu0 0.0
  %1432 = vmatpush1.msra.mxu0 0.0
  %1433 = vmatprep.subr.mxu0 0.0
  %1434 = vmatpush1.msra.mxu0 0.0
  %1435 = vmatprep.subr.mxu0 0.0
  %1436 = vmatpush1.msra.mxu0 0.0
  %1437 = vmatprep.mubr.f32.mxu0 0.0
  %1438 = vmatmul.mubr.f32.gmra.mrb[0].mxu0 %v1371
  %v1439 = vpop.f32.mrb[0].mxu0
  %v1440 = vadd.f32 %v236, %v1439
  %v1441 = vpop.f32.mrb[0].mxu0
  %1442 = vdwg.mxu0
  %v1443 = vtanh.pop %v1440
  %1444 = vst.msk [vmem:[#allocation2 + $0x8] sm:$0xc0] %vm801, %v1362
  %1445 = vst.msk [vmem:[#allocation3 + $0xe] sm:$0x3] %vm313, %v1443
  %v1446 = vld [vmem:[#allocation2] sm:$0xff]
  %v1447 = vld [vmem:[#allocation2 + $0x8] sm:$0xff]
  %v1448 = vld [vmem:[%s6] sm:$0xff]
  %v1449 = vld [vmem:[%s6 + $0x8] sm:$0xff]
  %v1450 = vld [vmem:[%s6 + $0x10] sm:$0xff]
  %v1451 = vld [vmem:[%s6 + $0x18] sm:$0xff]
  %v1452 = vld [vmem:[%s7] sm:$0x1]
  %v1454 = vlaneseq
  %v1455 = vshrl.u32 %v1454, 7
  %v1456 = vsub.s32 0, %v1455
  %v1457 = vrot.slane %v1452, %v1456
  %v1460 = vsel %vm155, %v1446, 0
  %v1463 = vsel %vm155, %v1447, 0
  %1465 = vmatprep.subr.mxu0 0.0
  %1466 = vmatpush1.msra.mxu0 %v1448
  %1467 = vmatprep.subr.mxu0 0.0
  %1468 = vmatpush1.msra.mxu0 %v1449
  %1469 = vmatprep.subr.mxu0 0.0
  %1470 = vmatpush1.msra.mxu0 %v1450
  %1471 = vmatprep.subr.mxu0 0.0
  %1472 = vmatpush1.msra.mxu0 %v1451
  %1473 = vmatprep.subr.mxu0 0.0
  %1474 = vmatpush1.msra.mxu0 0.0
  %1475 = vmatprep.subr.mxu0 0.0
  %1476 = vmatpush1.msra.mxu0 0.0
  %1477 = vmatprep.subr.mxu0 0.0
  %1478 = vmatpush1.msra.mxu0 0.0
  %1479 = vmatprep.subr.mxu0 0.0
  %1480 = vmatpush1.msra.mxu0 0.0
  %1481 = vmatprep.subr.mxu0 0.0
  %1482 = vmatpush1.msra.mxu0 0.0
  %1483 = vmatprep.subr.mxu0 0.0
  %1484 = vmatpush1.msra.mxu0 0.0
  %1485 = vmatprep.subr.mxu0 0.0
  %1486 = vmatpush1.msra.mxu0 0.0
  %1487 = vmatprep.subr.mxu0 0.0
  %1488 = vmatpush1.msra.mxu0 0.0
  %1489 = vmatprep.subr.mxu0 0.0
  %1490 = vmatpush1.msra.mxu0 0.0
  %1491 = vmatprep.subr.mxu0 0.0
  %1492 = vmatpush1.msra.mxu0 0.0
  %1493 = vmatprep.subr.mxu0 0.0
  %1494 = vmatpush1.msra.mxu0 0.0
  %1495 = vmatprep.subr.mxu0 0.0
  %1496 = vmatpush1.msra.mxu0 0.0
  %1497 = vmatprep.subr.mxu0 0.0
  %1498 = vmatpush1.msra.mxu0 0.0
  %1499 = vmatprep.subr.mxu0 0.0
  %1500 = vmatpush1.msra.mxu0 0.0
  %1501 = vmatprep.subr.mxu0 0.0
  %1502 = vmatpush1.msra.mxu0 0.0
  %1503 = vmatprep.subr.mxu0 0.0
  %1504 = vmatpush1.msra.mxu0 0.0
  %1505 = vmatprep.subr.mxu0 0.0
  %1506 = vmatpush1.msra.mxu0 0.0
  %1507 = vmatprep.subr.mxu0 0.0
  %1508 = vmatpush1.msra.mxu0 0.0
  %1509 = vmatprep.subr.mxu0 0.0
  %1510 = vmatpush1.msra.mxu0 0.0
  %1511 = vmatprep.subr.mxu0 0.0
  %1512 = vmatpush1.msra.mxu0 0.0
  %1513 = vmatprep.subr.mxu0 0.0
  %1514 = vmatpush1.msra.mxu0 0.0
  %1515 = vmatprep.subr.mxu0 0.0
  %1516 = vmatpush1.msra.mxu0 0.0
  %1517 = vmatprep.subr.mxu0 0.0
  %1518 = vmatpush1.msra.mxu0 0.0
  %1519 = vmatprep.subr.mxu0 0.0
  %1520 = vmatpush1.msra.mxu0 0.0
  %1521 = vmatprep.subr.mxu0 0.0
  %1522 = vmatpush1.msra.mxu0 0.0
  %1523 = vmatprep.subr.mxu0 0.0
  %1524 = vmatpush1.msra.mxu0 0.0
  %1525 = vmatprep.subr.mxu0 0.0
  %1526 = vmatpush1.msra.mxu0 0.0
  %1527 = vmatprep.subr.mxu0 0.0
  %1528 = vmatpush1.msra.mxu0 0.0
  %1529 = vmatprep.mubr.f32.mxu0 0.0
  %1530 = vmatmul.mubr.f32.gmra.mrb[0].mxu0 %v1460
  %v1531 = vpop.f32.mrb[0].mxu0
  %v1532 = vadd.f32 %v1457, %v1531
  %v1533 = vpop.f32.mrb[0].mxu0
  %1534 = vmatprep.mubr.f32.mxu0 0.0
  %1535 = vmatmul.mubr.f32.gmra.mrb[0].mxu0 %v1463
  %v1536 = vpop.f32.mrb[0].mxu0
  %v1537 = vadd.f32 %v1457, %v1536
  %v1538 = vpop.f32.mrb[0].mxu0
  %1539 = vdwg.mxu0
  %vm1540 = vcmask 130048
  %1541 = vst.msk [vmem:[%s10] sm:$0xff] %vm1540, %v1532
  %1542 = vst.msk [vmem:[%s10 + $0x8] sm:$0xff] %vm1540, %v1537
  %v1543 = vld [vmem:[#allocation3] sm:$0xff]
  %v1544 = vld [vmem:[#allocation3 + $0x8] sm:$0xff]
  %v1545 = vld [vmem:[%s8] sm:$0xff]
  %v1546 = vld [vmem:[%s8 + $0x8] sm:$0xff]
  %v1547 = vld [vmem:[%s8 + $0x10] sm:$0xff]
  %v1548 = vld [vmem:[%s8 + $0x18] sm:$0xff]
  %v1549 = vld [vmem:[%s9] sm:$0x1]
  %v1551 = vlaneseq
  %v1552 = vshrl.u32 %v1551, 7
  %v1553 = vsub.s32 0, %v1552
  %v1554 = vrot.slane %v1549, %v1553
  %v1557 = vsel %vm155, %v1543, 0
  %v1560 = vsel %vm155, %v1544, 0
  %1562 = vmatprep.subr.mxu0 0.0
  %1563 = vmatpush1.msra.mxu0 %v1545
  %1564 = vmatprep.subr.mxu0 0.0
  %1565 = vmatpush1.msra.mxu0 %v1546
  %1566 = vmatprep.subr.mxu0 0.0
  %1567 = vmatpush1.msra.mxu0 %v1547
  %1568 = vmatprep.subr.mxu0 0.0
  %1569 = vmatpush1.msra.mxu0 %v1548
  %1570 = vmatprep.subr.mxu0 0.0
  %1571 = vmatpush1.msra.mxu0 0.0
  %1572 = vmatprep.subr.mxu0 0.0
  %1573 = vmatpush1.msra.mxu0 0.0
  %1574 = vmatprep.subr.mxu0 0.0
  %1575 = vmatpush1.msra.mxu0 0.0
  %1576 = vmatprep.subr.mxu0 0.0
  %1577 = vmatpush1.msra.mxu0 0.0
  %1578 = vmatprep.subr.mxu0 0.0
  %1579 = vmatpush1.msra.mxu0 0.0
  %1580 = vmatprep.subr.mxu0 0.0
  %1581 = vmatpush1.msra.mxu0 0.0
  %1582 = vmatprep.subr.mxu0 0.0
  %1583 = vmatpush1.msra.mxu0 0.0
  %1584 = vmatprep.subr.mxu0 0.0
  %1585 = vmatpush1.msra.mxu0 0.0
  %1586 = vmatprep.subr.mxu0 0.0
  %1587 = vmatpush1.msra.mxu0 0.0
  %1588 = vmatprep.subr.mxu0 0.0
  %1589 = vmatpush1.msra.mxu0 0.0
  %1590 = vmatprep.subr.mxu0 0.0
  %1591 = vmatpush1.msra.mxu0 0.0
  %1592 = vmatprep.subr.mxu0 0.0
  %1593 = vmatpush1.msra.mxu0 0.0
  %1594 = vmatprep.subr.mxu0 0.0
  %1595 = vmatpush1.msra.mxu0 0.0
  %1596 = vmatprep.subr.mxu0 0.0
  %1597 = vmatpush1.msra.mxu0 0.0
  %1598 = vmatprep.subr.mxu0 0.0
  %1599 = vmatpush1.msra.mxu0 0.0
  %1600 = vmatprep.subr.mxu0 0.0
  %1601 = vmatpush1.msra.mxu0 0.0
  %1602 = vmatprep.subr.mxu0 0.0
  %1603 = vmatpush1.msra.mxu0 0.0
  %1604 = vmatprep.subr.mxu0 0.0
  %1605 = vmatpush1.msra.mxu0 0.0
  %1606 = vmatprep.subr.mxu0 0.0
  %1607 = vmatpush1.msra.mxu0 0.0
  %1608 = vmatprep.subr.mxu0 0.0
  %1609 = vmatpush1.msra.mxu0 0.0
  %1610 = vmatprep.subr.mxu0 0.0
  %1611 = vmatpush1.msra.mxu0 0.0
  %1612 = vmatprep.subr.mxu0 0.0
  %1613 = vmatpush1.msra.mxu0 0.0
  %1614 = vmatprep.subr.mxu0 0.0
  %1615 = vmatpush1.msra.mxu0 0.0
  %1616 = vmatprep.subr.mxu0 0.0
  %1617 = vmatpush1.msra.mxu0 0.0
  %1618 = vmatprep.subr.mxu0 0.0
  %1619 = vmatpush1.msra.mxu0 0.0
  %1620 = vmatprep.subr.mxu0 0.0
  %1621 = vmatpush1.msra.mxu0 0.0
  %1622 = vmatprep.subr.mxu0 0.0
  %1623 = vmatpush1.msra.mxu0 0.0
  %1624 = vmatprep.subr.mxu0 0.0
  %1625 = vmatpush1.msra.mxu0 0.0
  %1626 = vmatprep.mubr.f32.mxu0 0.0
  %1627 = vmatmul.mubr.f32.gmra.mrb[0].mxu0 %v1557
  %v1628 = vpop.f32.mrb[0].mxu0
  %v1629 = vadd.f32 %v1554, %v1628
  %v1630 = vpop.f32.mrb[0].mxu0
  %1631 = vmatprep.mubr.f32.mxu0 0.0
  %1632 = vmatmul.mubr.f32.gmra.mrb[0].mxu0 %v1560
  %v1633 = vpop.f32.mrb[0].mxu0
  %v1634 = vadd.f32 %v1554, %v1633
  %v1635 = vpop.f32.mrb[0].mxu0
  %1636 = vdwg.mxu0
  %1637 = vst.msk [vmem:[%s11] sm:$0xff] %vm1540, %v1629
  %1638 = vst.msk [vmem:[%s11 + $0x8] sm:$0xff] %vm1540, %v1634
  // Predicated region
  $region42: #{rnn_model_pallas.1} parent=0 // pred_check
    _
  $region43: #{rnn_model_pallas.1} parent=0 // pred_check_branch
    %1640 = sbr.rel (0) target = $region45
  $region44: #{rnn_model_pallas.1} parent=0 // pred_region
    _
  $region45: #{rnn_model_pallas.1} parent=0 // pred_fallthru
    _
  // Predicated region
  $region46: #{rnn_model_pallas.1} parent=0 // pred_check
    _
  $region47: #{rnn_model_pallas.1} parent=0 // pred_check_branch
    %1642 = sbr.rel (0) target = $region49
  $region48: #{rnn_model_pallas.1} parent=0 // pred_region
    _
  $region49: #{rnn_model_pallas.1} parent=0 // pred_fallthru
    _
  // Predicated region
  $region50: #{rnn_model_pallas.1} parent=0 // pred_check
    _
  $region51: #{rnn_model_pallas.1} parent=0 // pred_check_branch
    %1644 = sbr.rel (0) target = $region53
  $region52: #{rnn_model_pallas.1} parent=0 // pred_region
    _
  $region53: #{rnn_model_pallas.1} parent=0 // pred_fallthru
    _
  // Predicated region
  $region54: #{rnn_model_pallas.1} parent=0 // pred_check
    _
  $region55: #{rnn_model_pallas.1} parent=0 // pred_check_branch
    %1646 = sbr.rel (0) target = $region57
  $region56: #{rnn_model_pallas.1} parent=0 // pred_region
    _
  $region57: #{rnn_model_pallas.1} parent=0 // pred_fallthru
    _

</llo_original>
